<compile_context>
chip_gen: v7x
topology: tpu7x:2x2x1
jax: 0.10.0
libtpu: 0.0.40
codegen_flags: <defaults>
</compile_context>

<pallas_src>
import jax
import jax.numpy as jnp
from jax.experimental import pallas as pl
from jax.experimental.pallas import tpu as pltpu


# ----------------------------------------------------------------------------
# Stage 1: per-node dense gating + fusion  ->  h0
# ----------------------------------------------------------------------------
def dense_gate_kernel(x_ref, emb_ref, w_in_ref, b_in_ref,
                      w_a1x_ref, w_a1e_ref, w_a2x_ref, w_a2e_ref,
                      w_fx_ref, w_fe_ref, b_fus_ref, h0_ref):
    f32 = jnp.float32
    xw = jnp.dot(x_ref[...], w_in_ref[...], preferred_element_type=f32) + b_in_ref[...]
    emb = emb_ref[...]

    # attn_i(cat[x, emb]) == x @ W_i[:H] + emb @ W_i[H:]   (no concat)
    a1 = (jnp.dot(xw, w_a1x_ref[...], preferred_element_type=f32)
          + jnp.dot(emb, w_a1e_ref[...], preferred_element_type=f32))
    a2 = (jnp.dot(xw, w_a2x_ref[...], preferred_element_type=f32)
          + jnp.dot(emb, w_a2e_ref[...], preferred_element_type=f32))

    # leaky_relu(0.2) then softmax over the stacked pair (all f32 on the VPU)
    a1 = jnp.where(a1 > 0, a1, 0.2 * a1)
    a2 = jnp.where(a2 > 0, a2, 0.2 * a2)
    m = jnp.maximum(a1, a2)
    e1 = jnp.exp(a1 - m)
    e2 = jnp.exp(a2 - m)
    inv = pl.reciprocal(e1 + e2, approx=True)   # EUP slot, frees VPU

    xg = xw * (e1 * inv)     # x   *= a[:, :, 0]
    eg = emb * (e2 * inv)    # emb *= a[:, :, 1]

    # fusion_layer(cat[xg, eg]) == xg @ Wf[:H] + eg @ Wf[H:] + b
    h0_ref[...] = (jnp.dot(xg, w_fx_ref[...], preferred_element_type=f32)
                   + jnp.dot(eg, w_fe_ref[...], preferred_element_type=f32)
                   + b_fus_ref[...])


# ----------------------------------------------------------------------------
# Stage 2: h1 = relu(adj @ h0);  h1w = h1 @ W_hid + b_hid   (tiled over k)
# ----------------------------------------------------------------------------
def prop1_kernel(adj_ref, h0_ref, w_hid_ref, b_hid_ref, h1_ref, h1w_ref, acc_ref):
    k = pl.program_id(1)

    @pl.when(k == 0)
    def _():
        acc_ref[...] = jnp.zeros_like(acc_ref)

    # adj tile is bf16 in HBM; cast h0 tile to bf16 at the MXU input, f32 acc.
    acc_ref[...] += jnp.dot(adj_ref[...], h0_ref[...].astype(jnp.bfloat16),
                            preferred_element_type=jnp.float32)

    @pl.when(k == pl.num_programs(1) - 1)
    def _():
        h1 = jnp.maximum(acc_ref[...], 0.0)   # relu(dropout(.)); eval: dropout = id
        h1_ref[...] = h1
        h1w_ref[...] = (jnp.dot(h1, w_hid_ref[...],
                                preferred_element_type=jnp.float32)
                        + b_hid_ref[...])


# ----------------------------------------------------------------------------
# Stage 3: h2 = adj @ h1w;  logits = h0@Wo0 + h1@Wo1 + h2@Wo2 + b   (tiled)
# ----------------------------------------------------------------------------
def prop2_kernel(adj_ref, h1w_ref, h0_ref, h1_ref,
                 w_o0_ref, w_o1_ref, w_o2_ref, b_o_ref, logits_ref, acc_ref):
    k = pl.program_id(1)

    @pl.when(k == 0)
    def _():
        acc_ref[...] = jnp.zeros_like(acc_ref)

    acc_ref[...] += jnp.dot(adj_ref[...], h1w_ref[...].astype(jnp.bfloat16),
                            preferred_element_type=jnp.float32)

    @pl.when(k == pl.num_programs(1) - 1)
    def _():
        h2 = acc_ref[...]
        # out_layer(JK-cat[h0, h1, h2]) as split-weight accumulation
        logits_ref[...] = (
            jnp.dot(h0_ref[...], w_o0_ref[...], preferred_element_type=jnp.float32)
            + jnp.dot(h1_ref[...], w_o1_ref[...], preferred_element_type=jnp.float32)
            + jnp.dot(h2, w_o2_ref[...], preferred_element_type=jnp.float32)
            + b_o_ref[...])


# ----------------------------------------------------------------------------
# Wrapper
# ----------------------------------------------------------------------------
def thgnn_forward(x, emb, adj_norm, params, *, tm=128, tk=128):
    N, in_size = x.shape
    H = emb.shape[1]
    H2 = 2 * H
    out_size = params["b_out"].shape[1]
    OUT_PAD = 128 * ((out_size + 127) // 128)   # lane-dense padded output width
    f32 = jnp.float32

    assert N % tm == 0 and N % tk == 0, "N must be divisible by the tile sizes"

    # bf16 adjacency halves the dominant O(N^2) HBM traffic; all matmuls
    # accumulate in f32 via preferred_element_type.
    adj_bf16 = adj_norm.astype(jnp.bfloat16)

    # Split weights so the kernels never concatenate activations.
    w_a1x, w_a1e = params["w_a1"][:H], params["w_a1"][H:]
    w_a2x, w_a2e = params["w_a2"][:H], params["w_a2"][H:]
    w_fx, w_fe = params["w_fus"][:H], params["w_fus"][H:]

    w_out = params["w_out"]
    w_out_pad = jnp.zeros((w_out.shape[0], OUT_PAD), f32).at[:, :out_size].set(w_out)
    b_out_pad = jnp.zeros((1, OUT_PAD), f32).at[:, :out_size].set(params["b_out"])
    w_o0, w_o1, w_o2 = w_out_pad[:H2], w_out_pad[H2:2 * H2], w_out_pad[2 * H2:]

    grid_rows = N // tm
    grid_k = N // tk

    rows = lambda i: (i, 0)
    res1 = lambda i: (0, 0)
    adj_map = lambda i, k: (i, k)
    kcol_map = lambda i, k: (k, 0)
    irow_map = lambda i, k: (i, 0)
    res2 = lambda i, k: (0, 0)

    # ---- stage 1: row-parallel dense gating + fusion --------------------
    h0 = pl.pallas_call(
        dense_gate_kernel,
        out_shape=jax.ShapeDtypeStruct((N, H2), f32),
        grid=(grid_rows,),
        in_specs=[
            pl.BlockSpec((tm, in_size), rows),
            pl.BlockSpec((tm, H), rows),
            pl.BlockSpec((in_size, H), res1),
            pl.BlockSpec((1, H), res1),
            pl.BlockSpec((H, H), res1),
            pl.BlockSpec((H, H), res1),
            pl.BlockSpec((H, H), res1),
            pl.BlockSpec((H, H), res1),
            pl.BlockSpec((H, H2), res1),
            pl.BlockSpec((H, H2), res1),
            pl.BlockSpec((1, H2), res1),
        ],
        out_specs=pl.BlockSpec((tm, H2), rows),
        compiler_params=pltpu.CompilerParams(dimension_semantics=("parallel",)),
        cost_estimate=pl.CostEstimate(
            flops=2 * N * (in_size * H + 4 * H * H + 2 * H * H2),
            transcendentals=3 * N * H,
            bytes_accessed=4 * N * (in_size + H + H2),
        ),
    )(x, emb, params["w_in"], params["b_in"],
      w_a1x, w_a1e, w_a2x, w_a2e, w_fx, w_fe, params["b_fus"])

    prop_params = pltpu.CompilerParams(
        dimension_semantics=("parallel", "arbitrary"))

    # ---- stage 2: tiled adj @ h0 -> relu -> h1, hidden_layer -> h1w -----
    h1, h1w = pl.pallas_call(
        prop1_kernel,
        out_shape=(jax.ShapeDtypeStruct((N, H2), f32),
                   jax.ShapeDtypeStruct((N, H2), f32)),
        grid=(grid_rows, grid_k),
        in_specs=[
            pl.BlockSpec((tm, tk), adj_map),
            pl.BlockSpec((tk, H2), kcol_map),
            pl.BlockSpec((H2, H2), res2),
            pl.BlockSpec((1, H2), res2),
        ],
        out_specs=(pl.BlockSpec((tm, H2), irow_map),
                   pl.BlockSpec((tm, H2), irow_map)),
        scratch_shapes=[pltpu.VMEM((tm, H2), f32)],
        compiler_params=prop_params,
        cost_estimate=pl.CostEstimate(
            flops=2 * N * N * H2 + 2 * N * H2 * H2,
            transcendentals=0,
            bytes_accessed=2 * N * N + 3 * 4 * N * H2,
        ),
    )(adj_bf16, h0, params["w_hid"], params["b_hid"])

    # ---- stage 3: tiled adj @ h1w -> h2, JK-cat + out_layer -------------
    logits_pad = pl.pallas_call(
        prop2_kernel,
        out_shape=jax.ShapeDtypeStruct((N, OUT_PAD), f32),
        grid=(grid_rows, grid_k),
        in_specs=[
            pl.BlockSpec((tm, tk), adj_map),
            pl.BlockSpec((tk, H2), kcol_map),
            pl.BlockSpec((tm, H2), irow_map),
            pl.BlockSpec((tm, H2), irow_map),
            pl.BlockSpec((H2, OUT_PAD), res2),
            pl.BlockSpec((H2, OUT_PAD), res2),
            pl.BlockSpec((H2, OUT_PAD), res2),
            pl.BlockSpec((1, OUT_PAD), res2),
        ],
        out_specs=pl.BlockSpec((tm, OUT_PAD), irow_map),
        scratch_shapes=[pltpu.VMEM((tm, H2), f32)],
        compiler_params=prop_params,
        cost_estimate=pl.CostEstimate(
            flops=2 * N * N * H2 + 3 * 2 * N * H2 * OUT_PAD,
            transcendentals=0,
            bytes_accessed=2 * N * N + 4 * N * (3 * H2 + OUT_PAD),
        ),
    )(adj_bf16, h1w, h0, h1, w_o0, w_o1, w_o2, b_out_pad)

    logits = logits_pad[:, :out_size]
    probs = jax.nn.sigmoid(logits)   # trivial elementwise op kept in XLA
    return probs, logits


# ----------------------------------------------------------------------------
# Pure-JAX f32 reference (same math) for correctness sanity check.
# ----------------------------------------------------------------------------
def thgnn_reference(x, emb, adj, p):
    x = x @ p["w_in"] + p["b_in"]
    cat_xe = jnp.concatenate([x, emb], axis=1)
    a1 = jax.nn.leaky_relu(cat_xe @ p["w_a1"], 0.2)
    a2 = jax.nn.leaky_relu(cat_xe @ p["w_a2"], 0.2)
    a = jax.nn.softmax(jnp.stack([a1, a2], axis=-1), axis=-1)
    x = x * a[:, :, 0]
    emb = emb * a[:, :, 1]
    h0 = jnp.concatenate([x, emb], axis=1) @ p["w_fus"] + p["b_fus"]
    h1 = jax.nn.relu(adj @ h0)
    h2 = adj @ (h1 @ p["w_hid"] + p["b_hid"])
    jk = jnp.concatenate([h0, h1, h2], axis=1)
    logits = jk @ p["w_out"] + p["b_out"]
    return jax.nn.sigmoid(logits), logits


# ----------------------------------------------------------------------------
# Deterministic parameter / input construction.
# ----------------------------------------------------------------------------
def make_params(key, in_size, hidden, out_size, num_layer):
    ks = jax.random.split(key, 10)

    def u(k, shape, scale=0.1):
        return jax.random.uniform(k, shape, jnp.float32, -scale, scale)

    H = hidden
    return {
        "w_in": u(ks[0], (in_size, H)),                        # Linear(in, H)
        "b_in": u(ks[1], (1, H)),
        "w_a1": u(ks[2], (2 * H, H)),                          # Linear(2H, H, bias=False)
        "w_a2": u(ks[3], (2 * H, H)),
        "w_fus": u(ks[4], (2 * H, 2 * H)),                     # fusion Linear(2H, 2H)
        "b_fus": u(ks[5], (1, 2 * H)),
        "w_hid": u(ks[6], (2 * H, 2 * H)),                     # hidden Linear(2H, 2H)
        "b_hid": u(ks[7], (1, 2 * H)),
        "w_out": u(ks[8], (2 * H * (num_layer + 1), out_size)),  # out Linear(6H, out)
        "b_out": u(ks[9], (1, out_size)),
    }


if __name__ == "__main__":
    N = 256        # number of graph nodes (multiple of the 128 row/k tiles)
    IN_SIZE = 16   # raw node feature dim
    HIDDEN = 32
    OUT_SIZE = 4
    NUM_LAYER = 2

    key = jax.random.PRNGKey(0)
    k_x, k_e, k_a, k_p = jax.random.split(key, 4)

    x = jax.random.normal(k_x, (N, IN_SIZE), jnp.float32)
    emb = jax.random.normal(k_e, (N, HIDDEN), jnp.float32)   # stands in for tribe_encoder output

    # synthetic adjacency, row-normalized by in-degree (clamped to >= 1)
    # TODO(synk): verify dense-adj orientation (adj[i,j] = edge j->i) matches
    # DGL's in-degree normalization for a real graph.
    adj = (jax.random.uniform(k_a, (N, N)) > 0.9).astype(jnp.float32)
    deg = jnp.clip(adj.sum(axis=1, keepdims=True), 1.0, None)
    adj_norm = adj / deg

    params = make_params(k_p, IN_SIZE, HIDDEN, OUT_SIZE, NUM_LAYER)

    probs, logits = thgnn_forward(x, emb, adj_norm, params, tm=128, tk=128)
    probs = jax.block_until_ready(probs)
    logits = jax.block_until_ready(logits)

    probs_ref, logits_ref = thgnn_reference(x, emb, adj_norm, params)
    # bf16 adjacency / MXU inputs and approximate reciprocal => bf16-level tolerance
    assert jnp.allclose(logits, logits_ref, rtol=2e-2, atol=2e-2), \
        float(jnp.max(jnp.abs(logits - logits_ref)))
    assert jnp.allclose(probs, probs_ref, rtol=2e-2, atol=2e-2)

    print("KERNEL_OK")
</pallas_src>

<mosaic_0001>
module attributes {stable_mosaic.version = 11 : i64} {
  func.func @dense_gate_kernel(%arg0: i32, %arg1: memref<128x16xf32, #tpu.memory_space<vmem>>, %arg2: memref<128x32xf32, #tpu.memory_space<vmem>>, %arg3: memref<16x32xf32, #tpu.memory_space<vmem>>, %arg4: memref<1x32xf32, #tpu.memory_space<vmem>>, %arg5: memref<32x32xf32, #tpu.memory_space<vmem>>, %arg6: memref<32x32xf32, #tpu.memory_space<vmem>>, %arg7: memref<32x32xf32, #tpu.memory_space<vmem>>, %arg8: memref<32x32xf32, #tpu.memory_space<vmem>>, %arg9: memref<32x64xf32, #tpu.memory_space<vmem>>, %arg10: memref<32x64xf32, #tpu.memory_space<vmem>>, %arg11: memref<1x64xf32, #tpu.memory_space<vmem>>, %arg12: memref<128x64xf32, #tpu.memory_space<vmem>>) attributes {dimension_semantics = [#tpu.dimension_semantics<parallel>], iteration_bounds = array<i64: 2>, scalar_prefetch = 0 : i64, scratch_operands = 0 : i64, tpu.core_type = #tpu.core_type<tc>, window_params = [{transform_indices = @transform_0, window_bounds = array<i64: 128, 16>}, {transform_indices = @transform_1, window_bounds = array<i64: 128, 32>}, {pipeline_mode = #tpu.pipeline_mode<synchronous>, transform_indices = @transform_2, window_bounds = array<i64: 16, 32>}, {pipeline_mode = #tpu.pipeline_mode<synchronous>, transform_indices = @transform_3, window_bounds = array<i64: 1, 32>}, {pipeline_mode = #tpu.pipeline_mode<synchronous>, transform_indices = @transform_4, window_bounds = array<i64: 32, 32>}, {pipeline_mode = #tpu.pipeline_mode<synchronous>, transform_indices = @transform_5, window_bounds = array<i64: 32, 32>}, {pipeline_mode = #tpu.pipeline_mode<synchronous>, transform_indices = @transform_6, window_bounds = array<i64: 32, 32>}, {pipeline_mode = #tpu.pipeline_mode<synchronous>, transform_indices = @transform_7, window_bounds = array<i64: 32, 32>}, {pipeline_mode = #tpu.pipeline_mode<synchronous>, transform_indices = @transform_8, window_bounds = array<i64: 32, 64>}, {pipeline_mode = #tpu.pipeline_mode<synchronous>, transform_indices = @transform_9, window_bounds = array<i64: 32, 64>}, {pipeline_mode = #tpu.pipeline_mode<synchronous>, transform_indices = @transform_10, window_bounds = array<i64: 1, 64>}, {transform_indices = @transform_11, window_bounds = array<i64: 128, 64>}]} {
    %c0 = arith.constant 0 : index
    %c0_0 = arith.constant 0 : index
    %0 = vector.load %arg1[%c0, %c0_0] : memref<128x16xf32, #tpu.memory_space<vmem>>, vector<128x16xf32>
    %c0_1 = arith.constant 0 : index
    %c0_2 = arith.constant 0 : index
    %1 = vector.load %arg3[%c0_1, %c0_2] : memref<16x32xf32, #tpu.memory_space<vmem>>, vector<16x32xf32>
    %cst = arith.constant dense<0.000000e+00> : vector<128x32xf32>
    %2 = tpu.matmul %0, %1, %cst {dimension_numbers = #tpu.dot_dimension_numbers<[1], [0], [0], [1], [0, 0, 1, 1], [], []>} : vector<128x16xf32>, vector<16x32xf32>, vector<128x32xf32> -> vector<128x32xf32>
    %c0_3 = arith.constant 0 : index
    %c0_4 = arith.constant 0 : index
    %3 = vector.load %arg4[%c0_3, %c0_4] : memref<1x32xf32, #tpu.memory_space<vmem>>, vector<1x32xf32>
    %4 = vector.broadcast %3 : vector<1x32xf32> to vector<128x32xf32>
    %5 = arith.addf %2, %4 : vector<128x32xf32>
    %c0_5 = arith.constant 0 : index
    %c0_6 = arith.constant 0 : index
    %6 = vector.load %arg2[%c0_5, %c0_6] : memref<128x32xf32, #tpu.memory_space<vmem>>, vector<128x32xf32>
    %c0_7 = arith.constant 0 : index
    %c0_8 = arith.constant 0 : index
    %7 = vector.load %arg5[%c0_7, %c0_8] : memref<32x32xf32, #tpu.memory_space<vmem>>, vector<32x32xf32>
    %cst_9 = arith.constant dense<0.000000e+00> : vector<128x32xf32>
    %8 = tpu.matmul %5, %7, %cst_9 {dimension_numbers = #tpu.dot_dimension_numbers<[1], [0], [0], [1], [0, 0, 1, 1], [], []>} : vector<128x32xf32>, vector<32x32xf32>, vector<128x32xf32> -> vector<128x32xf32>
    %c0_10 = arith.constant 0 : index
    %c0_11 = arith.constant 0 : index
    %9 = vector.load %arg6[%c0_10, %c0_11] : memref<32x32xf32, #tpu.memory_space<vmem>>, vector<32x32xf32>
    %cst_12 = arith.constant dense<0.000000e+00> : vector<128x32xf32>
    %10 = tpu.matmul %6, %9, %cst_12 {dimension_numbers = #tpu.dot_dimension_numbers<[1], [0], [0], [1], [0, 0, 1, 1], [], []>} : vector<128x32xf32>, vector<32x32xf32>, vector<128x32xf32> -> vector<128x32xf32>
    %11 = arith.addf %8, %10 : vector<128x32xf32>
    %c0_13 = arith.constant 0 : index
    %c0_14 = arith.constant 0 : index
    %12 = vector.load %arg7[%c0_13, %c0_14] : memref<32x32xf32, #tpu.memory_space<vmem>>, vector<32x32xf32>
    %cst_15 = arith.constant dense<0.000000e+00> : vector<128x32xf32>
    %13 = tpu.matmul %5, %12, %cst_15 {dimension_numbers = #tpu.dot_dimension_numbers<[1], [0], [0], [1], [0, 0, 1, 1], [], []>} : vector<128x32xf32>, vector<32x32xf32>, vector<128x32xf32> -> vector<128x32xf32>
    %c0_16 = arith.constant 0 : index
    %c0_17 = arith.constant 0 : index
    %14 = vector.load %arg8[%c0_16, %c0_17] : memref<32x32xf32, #tpu.memory_space<vmem>>, vector<32x32xf32>
    %cst_18 = arith.constant dense<0.000000e+00> : vector<128x32xf32>
    %15 = tpu.matmul %6, %14, %cst_18 {dimension_numbers = #tpu.dot_dimension_numbers<[1], [0], [0], [1], [0, 0, 1, 1], [], []>} : vector<128x32xf32>, vector<32x32xf32>, vector<128x32xf32> -> vector<128x32xf32>
    %16 = arith.addf %13, %15 : vector<128x32xf32>
    %cst_19 = arith.constant 0.000000e+00 : f32
    %17 = vector.broadcast %cst_19 : f32 to vector<128x32xf32>
    %18 = arith.cmpf ogt, %11, %17 : vector<128x32xf32>
    %cst_20 = arith.constant 2.000000e-01 : f32
    %19 = vector.broadcast %cst_20 : f32 to vector<128x32xf32>
    %20 = arith.mulf %19, %11 : vector<128x32xf32>
    %21 = arith.select %18, %11, %20 : vector<128x32xi1>, vector<128x32xf32>
    %cst_21 = arith.constant 0.000000e+00 : f32
    %22 = vector.broadcast %cst_21 : f32 to vector<128x32xf32>
    %23 = arith.cmpf ogt, %16, %22 : vector<128x32xf32>
    %cst_22 = arith.constant 2.000000e-01 : f32
    %24 = vector.broadcast %cst_22 : f32 to vector<128x32xf32>
    %25 = arith.mulf %24, %16 : vector<128x32xf32>
    %26 = arith.select %23, %16, %25 : vector<128x32xi1>, vector<128x32xf32>
    %27 = arith.maximumf %21, %26 : vector<128x32xf32>
    %28 = arith.subf %21, %27 : vector<128x32xf32>
    %29 = math.exp %28 : vector<128x32xf32>
    %30 = arith.subf %26, %27 : vector<128x32xf32>
    %31 = math.exp %30 : vector<128x32xf32>
    %32 = arith.addf %29, %31 : vector<128x32xf32>
    %33 = tpu.reciprocal %32 {approx = true} : vector<128x32xf32> -> vector<128x32xf32>
    %34 = arith.mulf %29, %33 : vector<128x32xf32>
    %35 = arith.mulf %5, %34 : vector<128x32xf32>
    %36 = arith.mulf %31, %33 : vector<128x32xf32>
    %37 = arith.mulf %6, %36 : vector<128x32xf32>
    %c0_23 = arith.constant 0 : index
    %c0_24 = arith.constant 0 : index
    %38 = vector.load %arg9[%c0_23, %c0_24] : memref<32x64xf32, #tpu.memory_space<vmem>>, vector<32x64xf32>
    %cst_25 = arith.constant dense<0.000000e+00> : vector<128x64xf32>
    %39 = tpu.matmul %35, %38, %cst_25 {dimension_numbers = #tpu.dot_dimension_numbers<[1], [0], [0], [1], [0, 0, 1, 1], [], []>} : vector<128x32xf32>, vector<32x64xf32>, vector<128x64xf32> -> vector<128x64xf32>
    %c0_26 = arith.constant 0 : index
    %c0_27 = arith.constant 0 : index
    %40 = vector.load %arg10[%c0_26, %c0_27] : memref<32x64xf32, #tpu.memory_space<vmem>>, vector<32x64xf32>
    %cst_28 = arith.constant dense<0.000000e+00> : vector<128x64xf32>
    %41 = tpu.matmul %37, %40, %cst_28 {dimension_numbers = #tpu.dot_dimension_numbers<[1], [0], [0], [1], [0, 0, 1, 1], [], []>} : vector<128x32xf32>, vector<32x64xf32>, vector<128x64xf32> -> vector<128x64xf32>
    %42 = arith.addf %39, %41 : vector<128x64xf32>
    %c0_29 = arith.constant 0 : index
    %c0_30 = arith.constant 0 : index
    %43 = vector.load %arg11[%c0_29, %c0_30] : memref<1x64xf32, #tpu.memory_space<vmem>>, vector<1x64xf32>
    %44 = vector.broadcast %43 : vector<1x64xf32> to vector<128x64xf32>
    %45 = arith.addf %42, %44 : vector<128x64xf32>
    %c0_31 = arith.constant 0 : index
    %c0_32 = arith.constant 0 : index
    %46 = vector.load %arg12[%c0_31, %c0_32] : memref<128x64xf32, #tpu.memory_space<vmem>>, vector<128x64xf32>
    tpu.vector_store %arg12[%c0_31, %c0_32], %45 {strides = array<i32>} : memref<128x64xf32, #tpu.memory_space<vmem>>, vector<128x64xf32>,
    return
  }
  func.func @transform_0(%arg0: i32) -> (i32, i32) {
    %c0_i32 = arith.constant 0 : i32
    %c0_i32_0 = arith.constant 0 : i32
    return %arg0, %c0_i32 : i32, i32
  }
  func.func @transform_1(%arg0: i32) -> (i32, i32) {
    %c0_i32 = arith.constant 0 : i32
    %c0_i32_0 = arith.constant 0 : i32
    return %arg0, %c0_i32 : i32, i32
  }
  func.func @transform_2(%arg0: i32) -> (i32, i32) {
    %c0_i32 = arith.constant 0 : i32
    %c0_i32_0 = arith.constant 0 : i32
    %c0_i32_1 = arith.constant 0 : i32
    return %c0_i32, %c0_i32_0 : i32, i32
  }
  func.func @transform_3(%arg0: i32) -> (i32, i32) {
    %c0_i32 = arith.constant 0 : i32
    %c0_i32_0 = arith.constant 0 : i32
    %c0_i32_1 = arith.constant 0 : i32
    return %c0_i32, %c0_i32_0 : i32, i32
  }
  func.func @transform_4(%arg0: i32) -> (i32, i32) {
    %c0_i32 = arith.constant 0 : i32
    %c0_i32_0 = arith.constant 0 : i32
    %c0_i32_1 = arith.constant 0 : i32
    return %c0_i32, %c0_i32_0 : i32, i32
  }
  func.func @transform_5(%arg0: i32) -> (i32, i32) {
    %c0_i32 = arith.constant 0 : i32
    %c0_i32_0 = arith.constant 0 : i32
    %c0_i32_1 = arith.constant 0 : i32
    return %c0_i32, %c0_i32_0 : i32, i32
  }
  func.func @transform_6(%arg0: i32) -> (i32, i32) {
    %c0_i32 = arith.constant 0 : i32
    %c0_i32_0 = arith.constant 0 : i32
    %c0_i32_1 = arith.constant 0 : i32
    return %c0_i32, %c0_i32_0 : i32, i32
  }
  func.func @transform_7(%arg0: i32) -> (i32, i32) {
    %c0_i32 = arith.constant 0 : i32
    %c0_i32_0 = arith.constant 0 : i32
    %c0_i32_1 = arith.constant 0 : i32
    return %c0_i32, %c0_i32_0 : i32, i32
  }
  func.func @transform_8(%arg0: i32) -> (i32, i32) {
    %c0_i32 = arith.constant 0 : i32
    %c0_i32_0 = arith.constant 0 : i32
    %c0_i32_1 = arith.constant 0 : i32
    return %c0_i32, %c0_i32_0 : i32, i32
  }
  func.func @transform_9(%arg0: i32) -> (i32, i32) {
    %c0_i32 = arith.constant 0 : i32
    %c0_i32_0 = arith.constant 0 : i32
    %c0_i32_1 = arith.constant 0 : i32
    return %c0_i32, %c0_i32_0 : i32, i32
  }
  func.func @transform_10(%arg0: i32) -> (i32, i32) {
    %c0_i32 = arith.constant 0 : i32
    %c0_i32_0 = arith.constant 0 : i32
    %c0_i32_1 = arith.constant 0 : i32
    return %c0_i32, %c0_i32_0 : i32, i32
  }
  func.func @transform_11(%arg0: i32) -> (i32, i32) {
    %c0_i32 = arith.constant 0 : i32
    %c0_i32_0 = arith.constant 0 : i32
    return %arg0, %c0_i32 : i32, i32
  }
}

</mosaic_0001>

<llo_original>
// kernel: tpu_custom_call.1
$region0: #{tpu_custom_call.1}
  #allocation0 [shape = 'u32[]', space=smem, size = 0x4, offset = 0x4, fixed_abs, tag = 'smem constant byte address 0x4 - core index']
  #allocation1 [shape = 'u32[144,128]{1,0:T(1,128)}', space=vmem, size = 0x12000, scoped, tag = 'internal scratch']
  %s0 = inlined_call_operand.vmem [shape: f32[256,16], index: 0, kind: input, shape index: {}]
  %s1 = inlined_call_operand.vmem [shape: f32[256,32], index: 1, kind: input, shape index: {}]
  %s2 = inlined_call_operand.vmem [shape: f32[16,32], index: 2, kind: input, shape index: {}]
  %s3 = inlined_call_operand.vmem [shape: f32[1,32], index: 3, kind: input, shape index: {}]
  %s4 = inlined_call_operand.vmem [shape: f32[32,32], index: 4, kind: input, shape index: {}]
  %s5 = inlined_call_operand.vmem [shape: f32[32,32], index: 5, kind: input, shape index: {}]
  %s6 = inlined_call_operand.vmem [shape: f32[32,32], index: 6, kind: input, shape index: {}]
  %s7 = inlined_call_operand.vmem [shape: f32[32,32], index: 7, kind: input, shape index: {}]
  %s8 = inlined_call_operand.vmem [shape: f32[32,64], index: 8, kind: input, shape index: {}]
  %s9 = inlined_call_operand.vmem [shape: f32[32,64], index: 9, kind: input, shape index: {}]
  %s10 = inlined_call_operand.vmem [shape: f32[1,64], index: 10, kind: input, shape index: {}]
  %s11 = inlined_call_operand.vmem [shape: f32[256,64], index: 11, kind: output, shape index: {}]
  %s12 = sld [smem:[#allocation0]]
  $region77: #{tpu_custom_call.1} parent=0
    _
  %s14 = ssub.s32 1, %s12
  %s15 = scalar_select 0, %s14, %s12
  loop: start=0, step=1, limit=4
  $region2: #{tpu_custom_call.1} parent=0 // loop_pre_header
    _
  $region3: #{tpu_custom_call.1} parent=0 // loop_header
    %s17 = sphi 0, %s21
    %p18 = scmp.ge.s32.totalorder %s17, 4
    %s27 = sphi 0, %s29
    %s30 = sphi 0, %s27
    %s31 = sphi 0, %s30
    %s47 = sphi 0, %s31
    %s53 = sphi 0, %s55
    %s56 = sphi 0, %s53
    %s57 = sphi 0, %s56
    %s73 = sphi 0, %s57
    %s77 = sphi 0, %s77
    %s79 = sphi 0, %s77
    %s80 = sphi 0, %s79
    %s94 = sphi 0, %s80
    %s98 = sphi 0, %s98
    %s100 = sphi 0, %s98
    %s101 = sphi 0, %s100
    %s115 = sphi 0, %s101
    %s119 = sphi 0, %s119
    %s121 = sphi 0, %s119
    %s122 = sphi 0, %s121
    %s136 = sphi 0, %s122
    %s140 = sphi 0, %s140
    %s142 = sphi 0, %s140
    %s143 = sphi 0, %s142
    %s157 = sphi 0, %s143
    %s161 = sphi 0, %s161
    %s163 = sphi 0, %s161
    %s164 = sphi 0, %s163
    %s178 = sphi 0, %s164
    %s182 = sphi 0, %s182
    %s184 = sphi 0, %s182
    %s185 = sphi 0, %s184
    %s199 = sphi 0, %s185
    %s203 = sphi 0, %s203
    %s205 = sphi 0, %s203
    %s206 = sphi 0, %s205
    %s220 = sphi 0, %s206
    %s224 = sphi 0, %s224
    %s226 = sphi 0, %s224
    %s227 = sphi 0, %s226
    %s241 = sphi 0, %s227
    %s245 = sphi 0, %s245
    %s247 = sphi 0, %s245
    %s248 = sphi 0, %s247
    %s262 = sphi 0, %s248
    %s268 = sphi 0, %s270
    %s271 = sphi 0, %s268
    %s272 = sphi 0, %s271
    %s288 = sphi 0, %s272
  $region4: #{tpu_custom_call.1} parent=0 // loop_header_branch
    %20 = sbr.rel (%p18) target = $region8
  $region5: #{tpu_custom_call.1} parent=0 // loop_body
    %s22 = ssub.s32 %s17, 1
    %s23 = ssub.s32 %s17, 2
    %s24 = sadd.s32 %s17, 1
    %s25 = ssub.s32 %s17, %s24
    %p26 = scmp.eq.s32.totalorder %s25, 0
    %s28 = sadd.s32 %s27, 1
    %s29 = scalar_select %p26, %s27, %s28
    %p32 = pneg %p26
    %p33 = scmp.eq.s32.totalorder %s17, 1
    %p34 = por %p32, %p33
    %p35 = scmp.ne.s32.totalorder %s27, %s30
    %p36 = scmp.eq.s32.totalorder %s17, 0
    %p37 = por %p35, %p36
    %p38 = scmp.ne.s32.totalorder %s27, %s30
    %p39 = scmp.eq.s32.totalorder %s22, 1
    %p40 = por %p38, %p39
    %p41 = scmp.ne.s32.totalorder %s30, %s31
    %p42 = scmp.eq.s32.totalorder %s22, 0
    %p43 = por %p41, %p42
    %p44 = scmp.ne.s32.totalorder %s30, %s31
    %p45 = scmp.eq.s32.totalorder %s23, 1
    %p46 = por %p44, %p45
    %p48 = scmp.ne.s32.totalorder %s31, %s47
    %p49 = scmp.eq.s32.totalorder %s23, 0
    %p50 = por %p48, %p49
    %s51 = ssub.s32 %s17, %s24
    %p52 = scmp.eq.s32.totalorder %s51, 0
    %s54 = sadd.s32 %s53, 1
    %s55 = scalar_select %p52, %s53, %s54
    %p58 = pneg %p52
    %p59 = scmp.eq.s32.totalorder %s17, 1
    %p60 = por %p58, %p59
    %p61 = scmp.ne.s32.totalorder %s53, %s56
    %p62 = scmp.eq.s32.totalorder %s17, 0
    %p63 = por %p61, %p62
    %p64 = scmp.ne.s32.totalorder %s53, %s56
    %p65 = scmp.eq.s32.totalorder %s22, 1
    %p66 = por %p64, %p65
    %p67 = scmp.ne.s32.totalorder %s56, %s57
    %p68 = scmp.eq.s32.totalorder %s22, 0
    %p69 = por %p67, %p68
    %p70 = scmp.ne.s32.totalorder %s56, %s57
    %p71 = scmp.eq.s32.totalorder %s23, 1
    %p72 = por %p70, %p71
    %p74 = scmp.ne.s32.totalorder %s57, %s73
    %p75 = scmp.eq.s32.totalorder %s23, 0
    %p76 = por %p74, %p75
    %s78 = sadd.s32 %s77, 1
    %p81 = scmp.eq.s32.totalorder %s17, 1
    %p82 = scmp.ne.s32.totalorder %s77, %s79
    %p83 = scmp.eq.s32.totalorder %s17, 0
    %p84 = por %p82, %p83
    %p85 = scmp.ne.s32.totalorder %s77, %s79
    %p86 = scmp.eq.s32.totalorder %s22, 1
    %p87 = por %p85, %p86
    %p88 = scmp.ne.s32.totalorder %s79, %s80
    %p89 = scmp.eq.s32.totalorder %s22, 0
    %p90 = por %p88, %p89
    %p91 = scmp.ne.s32.totalorder %s79, %s80
    %p92 = scmp.eq.s32.totalorder %s23, 1
    %p93 = por %p91, %p92
    %p95 = scmp.ne.s32.totalorder %s80, %s94
    %p96 = scmp.eq.s32.totalorder %s23, 0
    %p97 = por %p95, %p96
    %s99 = sadd.s32 %s98, 1
    %p102 = scmp.eq.s32.totalorder %s17, 1
    %p103 = scmp.ne.s32.totalorder %s98, %s100
    %p104 = scmp.eq.s32.totalorder %s17, 0
    %p105 = por %p103, %p104
    %p106 = scmp.ne.s32.totalorder %s98, %s100
    %p107 = scmp.eq.s32.totalorder %s22, 1
    %p108 = por %p106, %p107
    %p109 = scmp.ne.s32.totalorder %s100, %s101
    %p110 = scmp.eq.s32.totalorder %s22, 0
    %p111 = por %p109, %p110
    %p112 = scmp.ne.s32.totalorder %s100, %s101
    %p113 = scmp.eq.s32.totalorder %s23, 1
    %p114 = por %p112, %p113
    %p116 = scmp.ne.s32.totalorder %s101, %s115
    %p117 = scmp.eq.s32.totalorder %s23, 0
    %p118 = por %p116, %p117
    %s120 = sadd.s32 %s119, 1
    %p123 = scmp.eq.s32.totalorder %s17, 1
    %p124 = scmp.ne.s32.totalorder %s119, %s121
    %p125 = scmp.eq.s32.totalorder %s17, 0
    %p126 = por %p124, %p125
    %p127 = scmp.ne.s32.totalorder %s119, %s121
    %p128 = scmp.eq.s32.totalorder %s22, 1
    %p129 = por %p127, %p128
    %p130 = scmp.ne.s32.totalorder %s121, %s122
    %p131 = scmp.eq.s32.totalorder %s22, 0
    %p132 = por %p130, %p131
    %p133 = scmp.ne.s32.totalorder %s121, %s122
    %p134 = scmp.eq.s32.totalorder %s23, 1
    %p135 = por %p133, %p134
    %p137 = scmp.ne.s32.totalorder %s122, %s136
    %p138 = scmp.eq.s32.totalorder %s23, 0
    %p139 = por %p137, %p138
    %s141 = sadd.s32 %s140, 1
    %p144 = scmp.eq.s32.totalorder %s17, 1
    %p145 = scmp.ne.s32.totalorder %s140, %s142
    %p146 = scmp.eq.s32.totalorder %s17, 0
    %p147 = por %p145, %p146
    %p148 = scmp.ne.s32.totalorder %s140, %s142
    %p149 = scmp.eq.s32.totalorder %s22, 1
    %p150 = por %p148, %p149
    %p151 = scmp.ne.s32.totalorder %s142, %s143
    %p152 = scmp.eq.s32.totalorder %s22, 0
    %p153 = por %p151, %p152
    %p154 = scmp.ne.s32.totalorder %s142, %s143
    %p155 = scmp.eq.s32.totalorder %s23, 1
    %p156 = por %p154, %p155
    %p158 = scmp.ne.s32.totalorder %s143, %s157
    %p159 = scmp.eq.s32.totalorder %s23, 0
    %p160 = por %p158, %p159
    %s162 = sadd.s32 %s161, 1
    %p165 = scmp.eq.s32.totalorder %s17, 1
    %p166 = scmp.ne.s32.totalorder %s161, %s163
    %p167 = scmp.eq.s32.totalorder %s17, 0
    %p168 = por %p166, %p167
    %p169 = scmp.ne.s32.totalorder %s161, %s163
    %p170 = scmp.eq.s32.totalorder %s22, 1
    %p171 = por %p169, %p170
    %p172 = scmp.ne.s32.totalorder %s163, %s164
    %p173 = scmp.eq.s32.totalorder %s22, 0
    %p174 = por %p172, %p173
    %p175 = scmp.ne.s32.totalorder %s163, %s164
    %p176 = scmp.eq.s32.totalorder %s23, 1
    %p177 = por %p175, %p176
    %p179 = scmp.ne.s32.totalorder %s164, %s178
    %p180 = scmp.eq.s32.totalorder %s23, 0
    %p181 = por %p179, %p180
    %s183 = sadd.s32 %s182, 1
    %p186 = scmp.eq.s32.totalorder %s17, 1
    %p187 = scmp.ne.s32.totalorder %s182, %s184
    %p188 = scmp.eq.s32.totalorder %s17, 0
    %p189 = por %p187, %p188
    %p190 = scmp.ne.s32.totalorder %s182, %s184
    %p191 = scmp.eq.s32.totalorder %s22, 1
    %p192 = por %p190, %p191
    %p193 = scmp.ne.s32.totalorder %s184, %s185
    %p194 = scmp.eq.s32.totalorder %s22, 0
    %p195 = por %p193, %p194
    %p196 = scmp.ne.s32.totalorder %s184, %s185
    %p197 = scmp.eq.s32.totalorder %s23, 1
    %p198 = por %p196, %p197
    %p200 = scmp.ne.s32.totalorder %s185, %s199
    %p201 = scmp.eq.s32.totalorder %s23, 0
    %p202 = por %p200, %p201
    %s204 = sadd.s32 %s203, 1
    %p207 = scmp.eq.s32.totalorder %s17, 1
    %p208 = scmp.ne.s32.totalorder %s203, %s205
    %p209 = scmp.eq.s32.totalorder %s17, 0
    %p210 = por %p208, %p209
    %p211 = scmp.ne.s32.totalorder %s203, %s205
    %p212 = scmp.eq.s32.totalorder %s22, 1
    %p213 = por %p211, %p212
    %p214 = scmp.ne.s32.totalorder %s205, %s206
    %p215 = scmp.eq.s32.totalorder %s22, 0
    %p216 = por %p214, %p215
    %p217 = scmp.ne.s32.totalorder %s205, %s206
    %p218 = scmp.eq.s32.totalorder %s23, 1
    %p219 = por %p217, %p218
    %p221 = scmp.ne.s32.totalorder %s206, %s220
    %p222 = scmp.eq.s32.totalorder %s23, 0
    %p223 = por %p221, %p222
    %s225 = sadd.s32 %s224, 1
    %p228 = scmp.eq.s32.totalorder %s17, 1
    %p229 = scmp.ne.s32.totalorder %s224, %s226
    %p230 = scmp.eq.s32.totalorder %s17, 0
    %p231 = por %p229, %p230
    %p232 = scmp.ne.s32.totalorder %s224, %s226
    %p233 = scmp.eq.s32.totalorder %s22, 1
    %p234 = por %p232, %p233
    %p235 = scmp.ne.s32.totalorder %s226, %s227
    %p236 = scmp.eq.s32.totalorder %s22, 0
    %p237 = por %p235, %p236
    %p238 = scmp.ne.s32.totalorder %s226, %s227
    %p239 = scmp.eq.s32.totalorder %s23, 1
    %p240 = por %p238, %p239
    %p242 = scmp.ne.s32.totalorder %s227, %s241
    %p243 = scmp.eq.s32.totalorder %s23, 0
    %p244 = por %p242, %p243
    %s246 = sadd.s32 %s245, 1
    %p249 = scmp.eq.s32.totalorder %s17, 1
    %p250 = scmp.ne.s32.totalorder %s245, %s247
    %p251 = scmp.eq.s32.totalorder %s17, 0
    %p252 = por %p250, %p251
    %p253 = scmp.ne.s32.totalorder %s245, %s247
    %p254 = scmp.eq.s32.totalorder %s22, 1
    %p255 = por %p253, %p254
    %p256 = scmp.ne.s32.totalorder %s247, %s248
    %p257 = scmp.eq.s32.totalorder %s22, 0
    %p258 = por %p256, %p257
    %p259 = scmp.ne.s32.totalorder %s247, %s248
    %p260 = scmp.eq.s32.totalorder %s23, 1
    %p261 = por %p259, %p260
    %p263 = scmp.ne.s32.totalorder %s248, %s262
    %p264 = scmp.eq.s32.totalorder %s23, 0
    %p265 = por %p263, %p264
    %s266 = ssub.s32 %s17, %s24
    %p267 = scmp.eq.s32.totalorder %s266, 0
    %s269 = sadd.s32 %s268, 1
    %s270 = scalar_select %p267, %s268, %s269
    %p273 = pneg %p267
    %p274 = scmp.eq.s32.totalorder %s17, 1
    %p275 = por %p273, %p274
    %p276 = scmp.ne.s32.totalorder %s268, %s271
    %p277 = scmp.eq.s32.totalorder %s17, 0
    %p278 = por %p276, %p277
    %p279 = scmp.ne.s32.totalorder %s268, %s271
    %p280 = scmp.eq.s32.totalorder %s22, 1
    %p281 = por %p279, %p280
    %p282 = scmp.ne.s32.totalorder %s271, %s272
    %p283 = scmp.eq.s32.totalorder %s22, 0
    %p284 = por %p282, %p283
    %p285 = scmp.ne.s32.totalorder %s271, %s272
    %p286 = scmp.eq.s32.totalorder %s23, 1
    %p287 = por %p285, %p286
    %p289 = scmp.ne.s32.totalorder %s272, %s288
    %p290 = scmp.eq.s32.totalorder %s23, 0
    %p291 = por %p289, %p290
    %p292 = scmp.le.s32.totalorder 1, %s17
    %p293 = scmp.lt.s32.totalorder %s17, 3
    %p294 = pnand %p292, %p293
    %p295 = pneg %p294
    // Predicated region
    $region9: #{tpu_custom_call.1} parent=5 // pred_check
      _
    $region10: #{tpu_custom_call.1} parent=5 // pred_check_branch
      %297 = sbr.rel (%p294) target = $region12
    $region11: #{tpu_custom_call.1} parent=5 // pred_region
      %s298 = ssub.s32 %s17, 1
      // Predicated region
      $region13: #{tpu_custom_call.1} parent=11 // pred_check
        %p299 = pneg %p90
      $region14: #{tpu_custom_call.1} parent=11 // pred_check_branch
        %301 = sbr.rel (%p299) target = $region16
      $region15: #{tpu_custom_call.1} parent=11 // pred_region
        _
      $region16: #{tpu_custom_call.1} parent=11 // pred_fallthru
        _
      // Predicated region
      $region17: #{tpu_custom_call.1} parent=11 // pred_check
        %p302 = pneg %p111
      $region18: #{tpu_custom_call.1} parent=11 // pred_check_branch
        %304 = sbr.rel (%p302) target = $region20
      $region19: #{tpu_custom_call.1} parent=11 // pred_region
        _
      $region20: #{tpu_custom_call.1} parent=11 // pred_fallthru
        _
      // Predicated region
      $region21: #{tpu_custom_call.1} parent=11 // pred_check
        %p305 = pneg %p132
      $region22: #{tpu_custom_call.1} parent=11 // pred_check_branch
        %307 = sbr.rel (%p305) target = $region24
      $region23: #{tpu_custom_call.1} parent=11 // pred_region
        _
      $region24: #{tpu_custom_call.1} parent=11 // pred_fallthru
        _
      // Predicated region
      $region25: #{tpu_custom_call.1} parent=11 // pred_check
        %p308 = pneg %p153
      $region26: #{tpu_custom_call.1} parent=11 // pred_check_branch
        %310 = sbr.rel (%p308) target = $region28
      $region27: #{tpu_custom_call.1} parent=11 // pred_region
        _
      $region28: #{tpu_custom_call.1} parent=11 // pred_fallthru
        _
      // Predicated region
      $region29: #{tpu_custom_call.1} parent=11 // pred_check
        %p311 = pneg %p174
      $region30: #{tpu_custom_call.1} parent=11 // pred_check_branch
        %313 = sbr.rel (%p311) target = $region32
      $region31: #{tpu_custom_call.1} parent=11 // pred_region
        _
      $region32: #{tpu_custom_call.1} parent=11 // pred_fallthru
        _
      // Predicated region
      $region33: #{tpu_custom_call.1} parent=11 // pred_check
        %p314 = pneg %p195
      $region34: #{tpu_custom_call.1} parent=11 // pred_check_branch
        %316 = sbr.rel (%p314) target = $region36
      $region35: #{tpu_custom_call.1} parent=11 // pred_region
        _
      $region36: #{tpu_custom_call.1} parent=11 // pred_fallthru
        _
      // Predicated region
      $region37: #{tpu_custom_call.1} parent=11 // pred_check
        %p317 = pneg %p216
      $region38: #{tpu_custom_call.1} parent=11 // pred_check_branch
        %319 = sbr.rel (%p317) target = $region40
      $region39: #{tpu_custom_call.1} parent=11 // pred_region
        _
      $region40: #{tpu_custom_call.1} parent=11 // pred_fallthru
        _
      // Predicated region
      $region41: #{tpu_custom_call.1} parent=11 // pred_check
        %p320 = pneg %p237
      $region42: #{tpu_custom_call.1} parent=11 // pred_check_branch
        %322 = sbr.rel (%p320) target = $region44
      $region43: #{tpu_custom_call.1} parent=11 // pred_region
        _
      $region44: #{tpu_custom_call.1} parent=11 // pred_fallthru
        _
      // Predicated region
      $region45: #{tpu_custom_call.1} parent=11 // pred_check
        %p323 = pneg %p258
      $region46: #{tpu_custom_call.1} parent=11 // pred_check_branch
        %325 = sbr.rel (%p323) target = $region48
      $region47: #{tpu_custom_call.1} parent=11 // pred_region
        _
      $region48: #{tpu_custom_call.1} parent=11 // pred_fallthru
        _
    $region12: #{tpu_custom_call.1} parent=5 // pred_fallthru
      _
    %p326 = scmp.lt.s32.totalorder %s17, 2
    // Predicated region
    $region49: #{tpu_custom_call.1} parent=5 // pred_check
      %p327 = pneg %p326
    $region50: #{tpu_custom_call.1} parent=5 // pred_check_branch
      %329 = sbr.rel (%p327) target = $region52
    $region51: #{tpu_custom_call.1} parent=5 // pred_region
      // Predicated region
      $region53: #{tpu_custom_call.1} parent=51 // pred_check
        %p330 = pneg %p37
      $region54: #{tpu_custom_call.1} parent=51 // pred_check_branch
        %332 = sbr.rel (%p330) target = $region56
      $region55: #{tpu_custom_call.1} parent=51 // pred_region
        %s333 = smul.u32 16, %s17
        %p334 = scmp.lt.s32.totalorder %s333, 31
        %s335 = scalar_select %p334, %s333, 31
        %s336 = smul.addr %s335, 8
        %s337 = scalar_lea.vmem %s0, %s336
        %s338 = smul.u32 16, %s17
      $region56: #{tpu_custom_call.1} parent=51 // pred_fallthru
        _
      // Predicated region
      $region57: #{tpu_custom_call.1} parent=51 // pred_check
        %p339 = pneg %p63
      $region58: #{tpu_custom_call.1} parent=51 // pred_check_branch
        %341 = sbr.rel (%p339) target = $region60
      $region59: #{tpu_custom_call.1} parent=51 // pred_region
        %s342 = smul.u32 16, %s17
        %p343 = scmp.lt.s32.totalorder %s342, 31
        %s344 = scalar_select %p343, %s342, 31
        %s345 = smul.addr %s344, 8
        %s346 = scalar_lea.vmem %s1, %s345
        %s347 = smul.u32 16, %s17
      $region60: #{tpu_custom_call.1} parent=51 // pred_fallthru
        _
    $region52: #{tpu_custom_call.1} parent=5 // pred_fallthru
      _
    %p348 = scmp.le.s32.totalorder 1, %s17
    %p349 = scmp.lt.s32.totalorder %s17, 3
    %p350 = pnand %p348, %p349
    %p351 = pneg %p350
    // Predicated region
    $region61: #{tpu_custom_call.1} parent=5 // pred_check
      _
    $region62: #{tpu_custom_call.1} parent=5 // pred_check_branch
      %353 = sbr.rel (%p350) target = $region64
    $region63: #{tpu_custom_call.1} parent=5 // pred_region
      %s354 = ssub.s32 %s17, 1
      %s355 = smul.u32 16, %s22
      %p356 = scmp.lt.s32.totalorder %s355, 31
      %s357 = scalar_select %p356, %s355, 31
      %s358 = smul.addr %s357, 8
      %s359 = scalar_lea.vmem %s0, %s358
      %p360 = pneg %p43
      %p361 = pneg %p40
      %s362 = smul.u32 16, %s22
      %p363 = scmp.lt.s32.totalorder %s362, 31
      %s364 = scalar_select %p363, %s362, 31
      %s365 = smul.addr %s364, 8
      %s366 = scalar_lea.vmem %s1, %s365
      %p367 = pneg %p69
      %p368 = pneg %p66
      %p369 = pneg %p90
      %p370 = pneg %p87
      %p371 = pneg %p111
      %p372 = pneg %p108
      %p373 = pneg %p132
      %p374 = pneg %p129
      %p375 = pneg %p153
      %p376 = pneg %p150
      %p377 = pneg %p174
      %p378 = pneg %p171
      %p379 = pneg %p195
      %p380 = pneg %p192
      %p381 = pneg %p216
      %p382 = pneg %p213
      %p383 = pneg %p237
      %p384 = pneg %p234
      %p385 = pneg %p258
      %p386 = pneg %p255
      %p387 = pneg %p284
      %p388 = pneg %p281
      %s389 = smul.u32 16, %s22
      %p390 = scmp.lt.s32.totalorder %s389, 31
      %s391 = scalar_select %p390, %s389, 31
      %s392 = smul.addr %s391, 8
      %s393 = scalar_lea.vmem %s11, %s392
      %s394 = smul.u32 16, %s22
      %p395 = scmp.lt.s32.totalorder %s394, 31
      %s396 = scalar_select %p395, %s394, 31
      %s397 = smul.addr %s396, 8
      %s398 = scalar_lea.vmem %s0, %s397
      %s399 = smul.u32 16, %s22
      %s400 = smul.u32 16, %s22
      %p401 = scmp.lt.s32.totalorder %s400, 31
      %s402 = scalar_select %p401, %s400, 31
      %s403 = smul.addr %s402, 8
      %s404 = scalar_lea.vmem %s1, %s403
      %s405 = smul.u32 16, %s22
      %s406 = smul.u32 16, %s22
      %p407 = scmp.lt.s32.totalorder %s406, 31
      %s408 = scalar_select %p407, %s406, 31
      %s409 = smul.addr %s408, 8
      %s410 = scalar_lea.vmem %s11, %s409
      %s411 = smul.u32 16, %s22
      %v412 = vld [vmem:[%s398] sm:$0xff]
      %v413 = vld [vmem:[%s398 + $0x8] sm:$0xff]
      %v414 = vld [vmem:[%s398 + $0x10] sm:$0xff]
      %v415 = vld [vmem:[%s398 + $0x18] sm:$0xff]
      %v416 = vld [vmem:[%s398 + $0x20] sm:$0xff]
      %v417 = vld [vmem:[%s398 + $0x28] sm:$0xff]
      %v418 = vld [vmem:[%s398 + $0x30] sm:$0xff]
      %v419 = vld [vmem:[%s398 + $0x38] sm:$0xff]
      %v420 = vld [vmem:[%s398 + $0x40] sm:$0xff]
      %v421 = vld [vmem:[%s398 + $0x48] sm:$0xff]
      %v422 = vld [vmem:[%s398 + $0x50] sm:$0xff]
      %v423 = vld [vmem:[%s398 + $0x58] sm:$0xff]
      %v424 = vld [vmem:[%s398 + $0x60] sm:$0xff]
      %v425 = vld [vmem:[%s398 + $0x68] sm:$0xff]
      %v426 = vld [vmem:[%s398 + $0x70] sm:$0xff]
      %v427 = vld [vmem:[%s398 + $0x78] sm:$0xff]
      %v428 = vld [vmem:[%s2] sm:$0xff]
      %v429 = vld [vmem:[%s2 + $0x8] sm:$0xff]
      %v430 = vld [vmem:[%s3] sm:$0x1]
      %v432 = vlaneseq
      %v433 = vshrl.u32 %v432, 7
      %v434 = vsub.s32 0, %v433
      %v435 = vrot.slane %v430, %v434
      %vm437 = vcmask 130048
      %v439 = vsel %vm437, %v412, 0
      %v442 = vsel %vm437, %v413, 0
      %v445 = vsel %vm437, %v414, 0
      %v448 = vsel %vm437, %v415, 0
      %v451 = vsel %vm437, %v416, 0
      %v454 = vsel %vm437, %v417, 0
      %v457 = vsel %vm437, %v418, 0
      %v460 = vsel %vm437, %v419, 0
      %v463 = vsel %vm437, %v420, 0
      %v466 = vsel %vm437, %v421, 0
      %v469 = vsel %vm437, %v422, 0
      %v472 = vsel %vm437, %v423, 0
      %v475 = vsel %vm437, %v424, 0
      %v478 = vsel %vm437, %v425, 0
      %v481 = vsel %vm437, %v426, 0
      %v484 = vsel %vm437, %v427, 0
      %486 = vmatprep.subr.mxu0 0.0
      %487 = vmatpush1.msra.mxu0 %v428
      %488 = vmatprep.subr.mxu0 0.0
      %489 = vmatpush1.msra.mxu0 %v429
      %490 = vmatprep.subr.mxu0 0.0
      %491 = vmatpush1.msra.mxu0 0.0
      %492 = vmatprep.subr.mxu0 0.0
      %493 = vmatpush1.msra.mxu0 0.0
      %494 = vmatprep.subr.mxu0 0.0
      %495 = vmatpush1.msra.mxu0 0.0
      %496 = vmatprep.subr.mxu0 0.0
      %497 = vmatpush1.msra.mxu0 0.0
      %498 = vmatprep.subr.mxu0 0.0
      %499 = vmatpush1.msra.mxu0 0.0
      %500 = vmatprep.subr.mxu0 0.0
      %501 = vmatpush1.msra.mxu0 0.0
      %502 = vmatprep.subr.mxu0 0.0
      %503 = vmatpush1.msra.mxu0 0.0
      %504 = vmatprep.subr.mxu0 0.0
      %505 = vmatpush1.msra.mxu0 0.0
      %506 = vmatprep.subr.mxu0 0.0
      %507 = vmatpush1.msra.mxu0 0.0
      %508 = vmatprep.subr.mxu0 0.0
      %509 = vmatpush1.msra.mxu0 0.0
      %510 = vmatprep.subr.mxu0 0.0
      %511 = vmatpush1.msra.mxu0 0.0
      %512 = vmatprep.subr.mxu0 0.0
      %513 = vmatpush1.msra.mxu0 0.0
      %514 = vmatprep.subr.mxu0 0.0
      %515 = vmatpush1.msra.mxu0 0.0
      %516 = vmatprep.subr.mxu0 0.0
      %517 = vmatpush1.msra.mxu0 0.0
      %518 = vmatprep.subr.mxu0 0.0
      %519 = vmatpush1.msra.mxu0 0.0
      %520 = vmatprep.subr.mxu0 0.0
      %521 = vmatpush1.msra.mxu0 0.0
      %522 = vmatprep.subr.mxu0 0.0
      %523 = vmatpush1.msra.mxu0 0.0
      %524 = vmatprep.subr.mxu0 0.0
      %525 = vmatpush1.msra.mxu0 0.0
      %526 = vmatprep.subr.mxu0 0.0
      %527 = vmatpush1.msra.mxu0 0.0
      %528 = vmatprep.subr.mxu0 0.0
      %529 = vmatpush1.msra.mxu0 0.0
      %530 = vmatprep.subr.mxu0 0.0
      %531 = vmatpush1.msra.mxu0 0.0
      %532 = vmatprep.subr.mxu0 0.0
      %533 = vmatpush1.msra.mxu0 0.0
      %534 = vmatprep.subr.mxu0 0.0
      %535 = vmatpush1.msra.mxu0 0.0
      %536 = vmatprep.subr.mxu0 0.0
      %537 = vmatpush1.msra.mxu0 0.0
      %538 = vmatprep.subr.mxu0 0.0
      %539 = vmatpush1.msra.mxu0 0.0
      %540 = vmatprep.subr.mxu0 0.0
      %541 = vmatpush1.msra.mxu0 0.0
      %542 = vmatprep.subr.mxu0 0.0
      %543 = vmatpush1.msra.mxu0 0.0
      %544 = vmatprep.subr.mxu0 0.0
      %545 = vmatpush1.msra.mxu0 0.0
      %546 = vmatprep.subr.mxu0 0.0
      %547 = vmatpush1.msra.mxu0 0.0
      %548 = vmatprep.subr.mxu0 0.0
      %549 = vmatpush1.msra.mxu0 0.0
      %550 = vmatprep.mubr.f32.mxu0 0.0
      %551 = vmatmul.mubr.f32.gmra.mrb[0].mxu0 %v439
      %v552 = vpop.f32.mrb[0].mxu0
      %v553 = vadd.f32 %v435, %v552
      %v554 = vpop.f32.mrb[0].mxu0
      %555 = vmatprep.mubr.f32.mxu0 0.0
      %556 = vmatmul.mubr.f32.gmra.mrb[0].mxu0 %v442
      %v557 = vpop.f32.mrb[0].mxu0
      %v558 = vadd.f32 %v435, %v557
      %v559 = vpop.f32.mrb[0].mxu0
      %560 = vmatprep.mubr.f32.mxu0 0.0
      %561 = vmatmul.mubr.f32.gmra.mrb[0].mxu0 %v445
      %v562 = vpop.f32.mrb[0].mxu0
      %v563 = vadd.f32 %v435, %v562
      %v564 = vpop.f32.mrb[0].mxu0
      %565 = vmatprep.mubr.f32.mxu0 0.0
      %566 = vmatmul.mubr.f32.gmra.mrb[0].mxu0 %v448
      %v567 = vpop.f32.mrb[0].mxu0
      %v568 = vadd.f32 %v435, %v567
      %v569 = vpop.f32.mrb[0].mxu0
      %570 = vmatprep.mubr.f32.mxu0 0.0
      %571 = vmatmul.mubr.f32.gmra.mrb[0].mxu0 %v451
      %v572 = vpop.f32.mrb[0].mxu0
      %v573 = vadd.f32 %v435, %v572
      %v574 = vpop.f32.mrb[0].mxu0
      %575 = vmatprep.mubr.f32.mxu0 0.0
      %576 = vmatmul.mubr.f32.gmra.mrb[0].mxu0 %v454
      %v577 = vpop.f32.mrb[0].mxu0
      %v578 = vadd.f32 %v435, %v577
      %v579 = vpop.f32.mrb[0].mxu0
      %580 = vmatprep.mubr.f32.mxu0 0.0
      %581 = vmatmul.mubr.f32.gmra.mrb[0].mxu0 %v457
      %v582 = vpop.f32.mrb[0].mxu0
      %v583 = vadd.f32 %v435, %v582
      %v584 = vpop.f32.mrb[0].mxu0
      %585 = vmatprep.mubr.f32.mxu0 0.0
      %586 = vmatmul.mubr.f32.gmra.mrb[0].mxu0 %v460
      %v587 = vpop.f32.mrb[0].mxu0
      %v588 = vadd.f32 %v435, %v587
      %v589 = vpop.f32.mrb[0].mxu0
      %590 = vmatprep.mubr.f32.mxu0 0.0
      %591 = vmatmul.mubr.f32.gmra.mrb[0].mxu0 %v463
      %v592 = vpop.f32.mrb[0].mxu0
      %v593 = vadd.f32 %v435, %v592
      %v594 = vpop.f32.mrb[0].mxu0
      %595 = vmatprep.mubr.f32.mxu0 0.0
      %596 = vmatmul.mubr.f32.gmra.mrb[0].mxu0 %v466
      %v597 = vpop.f32.mrb[0].mxu0
      %v598 = vadd.f32 %v435, %v597
      %v599 = vpop.f32.mrb[0].mxu0
      %600 = vmatprep.mubr.f32.mxu0 0.0
      %601 = vmatmul.mubr.f32.gmra.mrb[0].mxu0 %v469
      %v602 = vpop.f32.mrb[0].mxu0
      %v603 = vadd.f32 %v435, %v602
      %v604 = vpop.f32.mrb[0].mxu0
      %605 = vmatprep.mubr.f32.mxu0 0.0
      %606 = vmatmul.mubr.f32.gmra.mrb[0].mxu0 %v472
      %v607 = vpop.f32.mrb[0].mxu0
      %v608 = vadd.f32 %v435, %v607
      %v609 = vpop.f32.mrb[0].mxu0
      %610 = vmatprep.mubr.f32.mxu0 0.0
      %611 = vmatmul.mubr.f32.gmra.mrb[0].mxu0 %v475
      %v612 = vpop.f32.mrb[0].mxu0
      %v613 = vadd.f32 %v435, %v612
      %v614 = vpop.f32.mrb[0].mxu0
      %615 = vmatprep.mubr.f32.mxu0 0.0
      %616 = vmatmul.mubr.f32.gmra.mrb[0].mxu0 %v478
      %v617 = vpop.f32.mrb[0].mxu0
      %v618 = vadd.f32 %v435, %v617
      %v619 = vpop.f32.mrb[0].mxu0
      %620 = vmatprep.mubr.f32.mxu0 0.0
      %621 = vmatmul.mubr.f32.gmra.mrb[0].mxu0 %v481
      %v622 = vpop.f32.mrb[0].mxu0
      %v623 = vadd.f32 %v435, %v622
      %v624 = vpop.f32.mrb[0].mxu0
      %625 = vmatprep.mubr.f32.mxu0 0.0
      %626 = vmatmul.mubr.f32.gmra.mrb[0].mxu0 %v484
      %v627 = vpop.f32.mrb[0].mxu0
      %v628 = vadd.f32 %v435, %v627
      %v629 = vpop.f32.mrb[0].mxu0
      %630 = vdwg.mxu0
      %v631 = vld [vmem:[%s404] sm:$0xff]
      %v632 = vld [vmem:[%s404 + $0x8] sm:$0xff]
      %v633 = vld [vmem:[%s404 + $0x10] sm:$0xff]
      %v634 = vld [vmem:[%s404 + $0x18] sm:$0xff]
      %v635 = vld [vmem:[%s404 + $0x20] sm:$0xff]
      %v636 = vld [vmem:[%s404 + $0x28] sm:$0xff]
      %v637 = vld [vmem:[%s404 + $0x30] sm:$0xff]
      %v638 = vld [vmem:[%s404 + $0x38] sm:$0xff]
      %v639 = vld [vmem:[%s404 + $0x40] sm:$0xff]
      %v640 = vld [vmem:[%s404 + $0x48] sm:$0xff]
      %v641 = vld [vmem:[%s404 + $0x50] sm:$0xff]
      %v642 = vld [vmem:[%s404 + $0x58] sm:$0xff]
      %v643 = vld [vmem:[%s404 + $0x60] sm:$0xff]
      %v644 = vld [vmem:[%s404 + $0x68] sm:$0xff]
      %v645 = vld [vmem:[%s404 + $0x70] sm:$0xff]
      %v646 = vld [vmem:[%s404 + $0x78] sm:$0xff]
      %v647 = vld [vmem:[%s4] sm:$0xff]
      %v648 = vld [vmem:[%s4 + $0x8] sm:$0xff]
      %v649 = vld [vmem:[%s4 + $0x10] sm:$0xff]
      %v650 = vld [vmem:[%s4 + $0x18] sm:$0xff]
      %v651 = vld [vmem:[%s5] sm:$0xff]
      %v652 = vld [vmem:[%s5 + $0x8] sm:$0xff]
      %v653 = vld [vmem:[%s5 + $0x10] sm:$0xff]
      %v654 = vld [vmem:[%s5 + $0x18] sm:$0xff]
      %vm655 = vcmask 261120
      %v657 = vsel %vm655, %v631, 0
      %v660 = vsel %vm655, %v632, 0
      %v663 = vsel %vm655, %v633, 0
      %v666 = vsel %vm655, %v634, 0
      %v669 = vsel %vm655, %v635, 0
      %v672 = vsel %vm655, %v636, 0
      %v675 = vsel %vm655, %v637, 0
      %v678 = vsel %vm655, %v638, 0
      %v681 = vsel %vm655, %v639, 0
      %v684 = vsel %vm655, %v640, 0
      %v687 = vsel %vm655, %v641, 0
      %v690 = vsel %vm655, %v642, 0
      %v693 = vsel %vm655, %v643, 0
      %v696 = vsel %vm655, %v644, 0
      %v699 = vsel %vm655, %v645, 0
      %v702 = vsel %vm655, %v646, 0
      %704 = vmatprep.subr.mxu0 0.0
      %705 = vmatpush1.msra.mxu0 %v651
      %706 = vmatprep.subr.mxu0 0.0
      %707 = vmatpush1.msra.mxu0 %v652
      %708 = vmatprep.subr.mxu0 0.0
      %709 = vmatpush1.msra.mxu0 %v653
      %710 = vmatprep.subr.mxu0 0.0
      %711 = vmatpush1.msra.mxu0 %v654
      %712 = vmatprep.subr.mxu0 0.0
      %713 = vmatpush1.msra.mxu0 0.0
      %714 = vmatprep.subr.mxu0 0.0
      %715 = vmatpush1.msra.mxu0 0.0
      %716 = vmatprep.subr.mxu0 0.0
      %717 = vmatpush1.msra.mxu0 0.0
      %718 = vmatprep.subr.mxu0 0.0
      %719 = vmatpush1.msra.mxu0 0.0
      %720 = vmatprep.subr.mxu0 0.0
      %721 = vmatpush1.msra.mxu0 0.0
      %722 = vmatprep.subr.mxu0 0.0
      %723 = vmatpush1.msra.mxu0 0.0
      %724 = vmatprep.subr.mxu0 0.0
      %725 = vmatpush1.msra.mxu0 0.0
      %726 = vmatprep.subr.mxu0 0.0
      %727 = vmatpush1.msra.mxu0 0.0
      %728 = vmatprep.subr.mxu0 0.0
      %729 = vmatpush1.msra.mxu0 0.0
      %730 = vmatprep.subr.mxu0 0.0
      %731 = vmatpush1.msra.mxu0 0.0
      %732 = vmatprep.subr.mxu0 0.0
      %733 = vmatpush1.msra.mxu0 0.0
      %734 = vmatprep.subr.mxu0 0.0
      %735 = vmatpush1.msra.mxu0 0.0
      %736 = vmatprep.subr.mxu0 0.0
      %737 = vmatpush1.msra.mxu0 0.0
      %738 = vmatprep.subr.mxu0 0.0
      %739 = vmatpush1.msra.mxu0 0.0
      %740 = vmatprep.subr.mxu0 0.0
      %741 = vmatpush1.msra.mxu0 0.0
      %742 = vmatprep.subr.mxu0 0.0
      %743 = vmatpush1.msra.mxu0 0.0
      %744 = vmatprep.subr.mxu0 0.0
      %745 = vmatpush1.msra.mxu0 0.0
      %746 = vmatprep.subr.mxu0 0.0
      %747 = vmatpush1.msra.mxu0 0.0
      %748 = vmatprep.subr.mxu0 0.0
      %749 = vmatpush1.msra.mxu0 0.0
      %750 = vmatprep.subr.mxu0 0.0
      %751 = vmatpush1.msra.mxu0 0.0
      %752 = vmatprep.subr.mxu0 0.0
      %753 = vmatpush1.msra.mxu0 0.0
      %754 = vmatprep.subr.mxu0 0.0
      %755 = vmatpush1.msra.mxu0 0.0
      %756 = vmatprep.subr.mxu0 0.0
      %757 = vmatpush1.msra.mxu0 0.0
      %758 = vmatprep.subr.mxu0 0.0
      %759 = vmatpush1.msra.mxu0 0.0
      %760 = vmatprep.subr.mxu0 0.0
      %761 = vmatpush1.msra.mxu0 0.0
      %762 = vmatprep.subr.mxu0 0.0
      %763 = vmatpush1.msra.mxu0 0.0
      %764 = vmatprep.subr.mxu0 0.0
      %765 = vmatpush1.msra.mxu0 0.0
      %766 = vmatprep.subr.mxu0 0.0
      %767 = vmatpush1.msra.mxu0 0.0
      %768 = vmatprep.mubr.f32.mxu0 0.0
      %769 = vmatmul.mubr.f32.gmra.mrb[0].mxu0 %v657
      %v770 = vpop.f32.mrb[0].mxu0
      %v771 = vadd.f32 0.0, %v770
      %v772 = vpop.f32.mrb[0].mxu0
      %773 = vmatprep.mubr.f32.mxu0 0.0
      %774 = vmatmul.mubr.f32.gmra.mrb[0].mxu0 %v660
      %v775 = vpop.f32.mrb[0].mxu0
      %v776 = vadd.f32 0.0, %v775
      %v777 = vpop.f32.mrb[0].mxu0
      %778 = vmatprep.mubr.f32.mxu0 0.0
      %779 = vmatmul.mubr.f32.gmra.mrb[0].mxu0 %v663
      %v780 = vpop.f32.mrb[0].mxu0
      %v781 = vadd.f32 0.0, %v780
      %v782 = vpop.f32.mrb[0].mxu0
      %783 = vmatprep.mubr.f32.mxu0 0.0
      %784 = vmatmul.mubr.f32.gmra.mrb[0].mxu0 %v666
      %v785 = vpop.f32.mrb[0].mxu0
      %v786 = vadd.f32 0.0, %v785
      %v787 = vpop.f32.mrb[0].mxu0
      %788 = vmatprep.mubr.f32.mxu0 0.0
      %789 = vmatmul.mubr.f32.gmra.mrb[0].mxu0 %v669
      %v790 = vpop.f32.mrb[0].mxu0
      %v791 = vadd.f32 0.0, %v790
      %v792 = vpop.f32.mrb[0].mxu0
      %793 = vmatprep.mubr.f32.mxu0 0.0
      %794 = vmatmul.mubr.f32.gmra.mrb[0].mxu0 %v672
      %v795 = vpop.f32.mrb[0].mxu0
      %v796 = vadd.f32 0.0, %v795
      %v797 = vpop.f32.mrb[0].mxu0
      %798 = vmatprep.mubr.f32.mxu0 0.0
      %799 = vmatmul.mubr.f32.gmra.mrb[0].mxu0 %v675
      %v800 = vpop.f32.mrb[0].mxu0
      %v801 = vadd.f32 0.0, %v800
      %v802 = vpop.f32.mrb[0].mxu0
      %803 = vmatprep.mubr.f32.mxu0 0.0
      %804 = vmatmul.mubr.f32.gmra.mrb[0].mxu0 %v678
      %v805 = vpop.f32.mrb[0].mxu0
      %v806 = vadd.f32 0.0, %v805
      %v807 = vpop.f32.mrb[0].mxu0
      %808 = vmatprep.mubr.f32.mxu0 0.0
      %809 = vmatmul.mubr.f32.gmra.mrb[0].mxu0 %v681
      %v810 = vpop.f32.mrb[0].mxu0
      %v811 = vadd.f32 0.0, %v810
      %v812 = vpop.f32.mrb[0].mxu0
      %813 = vmatprep.mubr.f32.mxu0 0.0
      %814 = vmatmul.mubr.f32.gmra.mrb[0].mxu0 %v684
      %v815 = vpop.f32.mrb[0].mxu0
      %v816 = vadd.f32 0.0, %v815
      %v817 = vpop.f32.mrb[0].mxu0
      %818 = vmatprep.mubr.f32.mxu0 0.0
      %819 = vmatmul.mubr.f32.gmra.mrb[0].mxu0 %v687
      %v820 = vpop.f32.mrb[0].mxu0
      %v821 = vadd.f32 0.0, %v820
      %v822 = vpop.f32.mrb[0].mxu0
      %823 = vmatprep.mubr.f32.mxu0 0.0
      %824 = vmatmul.mubr.f32.gmra.mrb[0].mxu0 %v690
      %v825 = vpop.f32.mrb[0].mxu0
      %v826 = vadd.f32 0.0, %v825
      %v827 = vpop.f32.mrb[0].mxu0
      %828 = vmatprep.mubr.f32.mxu0 0.0
      %829 = vmatmul.mubr.f32.gmra.mrb[0].mxu0 %v693
      %v830 = vpop.f32.mrb[0].mxu0
      %v831 = vadd.f32 0.0, %v830
      %v832 = vpop.f32.mrb[0].mxu0
      %833 = vmatprep.mubr.f32.mxu0 0.0
      %834 = vmatmul.mubr.f32.gmra.mrb[0].mxu0 %v696
      %v835 = vpop.f32.mrb[0].mxu0
      %v836 = vadd.f32 0.0, %v835
      %v837 = vpop.f32.mrb[0].mxu0
      %838 = vmatprep.mubr.f32.mxu0 0.0
      %839 = vmatmul.mubr.f32.gmra.mrb[0].mxu0 %v699
      %v840 = vpop.f32.mrb[0].mxu0
      %v841 = vadd.f32 0.0, %v840
      %v842 = vpop.f32.mrb[0].mxu0
      %843 = vmatprep.mubr.f32.mxu0 0.0
      %844 = vmatmul.mubr.f32.gmra.mrb[0].mxu0 %v702
      %v845 = vpop.f32.mrb[0].mxu0
      %v846 = vadd.f32 0.0, %v845
      %v847 = vpop.f32.mrb[0].mxu0
      %848 = vdwg.mxu0
      %v850 = vsel %vm655, %v553, 0
      %v853 = vsel %vm655, %v558, 0
      %v856 = vsel %vm655, %v563, 0
      %v859 = vsel %vm655, %v568, 0
      %v862 = vsel %vm655, %v573, 0
      %v865 = vsel %vm655, %v578, 0
      %v868 = vsel %vm655, %v583, 0
      %v871 = vsel %vm655, %v588, 0
      %v874 = vsel %vm655, %v593, 0
      %v877 = vsel %vm655, %v598, 0
      %v880 = vsel %vm655, %v603, 0
      %v883 = vsel %vm655, %v608, 0
      %v886 = vsel %vm655, %v613, 0
      %v889 = vsel %vm655, %v618, 0
      %v892 = vsel %vm655, %v623, 0
      %v895 = vsel %vm655, %v628, 0
      %897 = vmatprep.subr.mxu0 0.0
      %898 = vmatpush1.msra.mxu0 %v647
      %899 = vmatprep.subr.mxu0 0.0
      %900 = vmatpush1.msra.mxu0 %v648
      %901 = vmatprep.subr.mxu0 0.0
      %902 = vmatpush1.msra.mxu0 %v649
      %903 = vmatprep.subr.mxu0 0.0
      %904 = vmatpush1.msra.mxu0 %v650
      %905 = vmatprep.subr.mxu0 0.0
      %906 = vmatpush1.msra.mxu0 0.0
      %907 = vmatprep.subr.mxu0 0.0
      %908 = vmatpush1.msra.mxu0 0.0
      %909 = vmatprep.subr.mxu0 0.0
      %910 = vmatpush1.msra.mxu0 0.0
      %911 = vmatprep.subr.mxu0 0.0
      %912 = vmatpush1.msra.mxu0 0.0
      %913 = vmatprep.subr.mxu0 0.0
      %914 = vmatpush1.msra.mxu0 0.0
      %915 = vmatprep.subr.mxu0 0.0
      %916 = vmatpush1.msra.mxu0 0.0
      %917 = vmatprep.subr.mxu0 0.0
      %918 = vmatpush1.msra.mxu0 0.0
      %919 = vmatprep.subr.mxu0 0.0
      %920 = vmatpush1.msra.mxu0 0.0
      %921 = vmatprep.subr.mxu0 0.0
      %922 = vmatpush1.msra.mxu0 0.0
      %923 = vmatprep.subr.mxu0 0.0
      %924 = vmatpush1.msra.mxu0 0.0
      %925 = vmatprep.subr.mxu0 0.0
      %926 = vmatpush1.msra.mxu0 0.0
      %927 = vmatprep.subr.mxu0 0.0
      %928 = vmatpush1.msra.mxu0 0.0
      %929 = vmatprep.subr.mxu0 0.0
      %930 = vmatpush1.msra.mxu0 0.0
      %931 = vmatprep.subr.mxu0 0.0
      %932 = vmatpush1.msra.mxu0 0.0
      %933 = vmatprep.subr.mxu0 0.0
      %934 = vmatpush1.msra.mxu0 0.0
      %935 = vmatprep.subr.mxu0 0.0
      %936 = vmatpush1.msra.mxu0 0.0
      %937 = vmatprep.subr.mxu0 0.0
      %938 = vmatpush1.msra.mxu0 0.0
      %939 = vmatprep.subr.mxu0 0.0
      %940 = vmatpush1.msra.mxu0 0.0
      %941 = vmatprep.subr.mxu0 0.0
      %942 = vmatpush1.msra.mxu0 0.0
      %943 = vmatprep.subr.mxu0 0.0
      %944 = vmatpush1.msra.mxu0 0.0
      %945 = vmatprep.subr.mxu0 0.0
      %946 = vmatpush1.msra.mxu0 0.0
      %947 = vmatprep.subr.mxu0 0.0
      %948 = vmatpush1.msra.mxu0 0.0
      %949 = vmatprep.subr.mxu0 0.0
      %950 = vmatpush1.msra.mxu0 0.0
      %951 = vmatprep.subr.mxu0 0.0
      %952 = vmatpush1.msra.mxu0 0.0
      %953 = vmatprep.subr.mxu0 0.0
      %954 = vmatpush1.msra.mxu0 0.0
      %955 = vmatprep.subr.mxu0 0.0
      %956 = vmatpush1.msra.mxu0 0.0
      %957 = vmatprep.subr.mxu0 0.0
      %958 = vmatpush1.msra.mxu0 0.0
      %959 = vmatprep.subr.mxu0 0.0
      %960 = vmatpush1.msra.mxu0 0.0
      %961 = vmatprep.mubr.f32.mxu0 0.0
      %962 = vmatmul.mubr.f32.gmra.mrb[0].mxu0 %v850
      %v963 = vpop.f32.mrb[0].mxu0
      %v964 = vadd.f32 %v771, %v963
      %v965 = vpop.f32.mrb[0].mxu0
      %966 = vmatprep.mubr.f32.mxu0 0.0
      %967 = vmatmul.mubr.f32.gmra.mrb[0].mxu0 %v853
      %v968 = vpop.f32.mrb[0].mxu0
      %v969 = vadd.f32 %v776, %v968
      %v970 = vpop.f32.mrb[0].mxu0
      %971 = vmatprep.mubr.f32.mxu0 0.0
      %972 = vmatmul.mubr.f32.gmra.mrb[0].mxu0 %v856
      %v973 = vpop.f32.mrb[0].mxu0
      %v974 = vadd.f32 %v781, %v973
      %v975 = vpop.f32.mrb[0].mxu0
      %976 = vmatprep.mubr.f32.mxu0 0.0
      %977 = vmatmul.mubr.f32.gmra.mrb[0].mxu0 %v859
      %v978 = vpop.f32.mrb[0].mxu0
      %v979 = vadd.f32 %v786, %v978
      %v980 = vpop.f32.mrb[0].mxu0
      %981 = vmatprep.mubr.f32.mxu0 0.0
      %982 = vmatmul.mubr.f32.gmra.mrb[0].mxu0 %v862
      %v983 = vpop.f32.mrb[0].mxu0
      %v984 = vadd.f32 %v791, %v983
      %v985 = vpop.f32.mrb[0].mxu0
      %986 = vmatprep.mubr.f32.mxu0 0.0
      %987 = vmatmul.mubr.f32.gmra.mrb[0].mxu0 %v865
      %v988 = vpop.f32.mrb[0].mxu0
      %v989 = vadd.f32 %v796, %v988
      %v990 = vpop.f32.mrb[0].mxu0
      %991 = vmatprep.mubr.f32.mxu0 0.0
      %992 = vmatmul.mubr.f32.gmra.mrb[0].mxu0 %v868
      %v993 = vpop.f32.mrb[0].mxu0
      %v994 = vadd.f32 %v801, %v993
      %v995 = vpop.f32.mrb[0].mxu0
      %996 = vmatprep.mubr.f32.mxu0 0.0
      %997 = vmatmul.mubr.f32.gmra.mrb[0].mxu0 %v871
      %v998 = vpop.f32.mrb[0].mxu0
      %v999 = vadd.f32 %v806, %v998
      %v1000 = vpop.f32.mrb[0].mxu0
      %1001 = vmatprep.mubr.f32.mxu0 0.0
      %1002 = vmatmul.mubr.f32.gmra.mrb[0].mxu0 %v874
      %v1003 = vpop.f32.mrb[0].mxu0
      %v1004 = vadd.f32 %v811, %v1003
      %v1005 = vpop.f32.mrb[0].mxu0
      %1006 = vmatprep.mubr.f32.mxu0 0.0
      %1007 = vmatmul.mubr.f32.gmra.mrb[0].mxu0 %v877
      %v1008 = vpop.f32.mrb[0].mxu0
      %v1009 = vadd.f32 %v816, %v1008
      %v1010 = vpop.f32.mrb[0].mxu0
      %1011 = vmatprep.mubr.f32.mxu0 0.0
      %1012 = vmatmul.mubr.f32.gmra.mrb[0].mxu0 %v880
      %v1013 = vpop.f32.mrb[0].mxu0
      %v1014 = vadd.f32 %v821, %v1013
      %v1015 = vpop.f32.mrb[0].mxu0
      %1016 = vmatprep.mubr.f32.mxu0 0.0
      %1017 = vmatmul.mubr.f32.gmra.mrb[0].mxu0 %v883
      %v1018 = vpop.f32.mrb[0].mxu0
      %v1019 = vadd.f32 %v826, %v1018
      %v1020 = vpop.f32.mrb[0].mxu0
      %1021 = vmatprep.mubr.f32.mxu0 0.0
      %1022 = vmatmul.mubr.f32.gmra.mrb[0].mxu0 %v886
      %v1023 = vpop.f32.mrb[0].mxu0
      %v1024 = vadd.f32 %v831, %v1023
      %v1025 = vpop.f32.mrb[0].mxu0
      %1026 = vmatprep.mubr.f32.mxu0 0.0
      %1027 = vmatmul.mubr.f32.gmra.mrb[0].mxu0 %v889
      %v1028 = vpop.f32.mrb[0].mxu0
      %v1029 = vadd.f32 %v836, %v1028
      %v1030 = vpop.f32.mrb[0].mxu0
      %1031 = vmatprep.mubr.f32.mxu0 0.0
      %1032 = vmatmul.mubr.f32.gmra.mrb[0].mxu0 %v892
      %v1033 = vpop.f32.mrb[0].mxu0
      %v1034 = vadd.f32 %v841, %v1033
      %v1035 = vpop.f32.mrb[0].mxu0
      %1036 = vmatprep.mubr.f32.mxu0 0.0
      %1037 = vmatmul.mubr.f32.gmra.mrb[0].mxu0 %v895
      %v1038 = vpop.f32.mrb[0].mxu0
      %v1039 = vadd.f32 %v846, %v1038
      %v1040 = vpop.f32.mrb[0].mxu0
      %1041 = vdwg.mxu0
      %v1042 = vld [vmem:[%s6] sm:$0xff]
      %v1043 = vld [vmem:[%s6 + $0x8] sm:$0xff]
      %v1044 = vld [vmem:[%s6 + $0x10] sm:$0xff]
      %v1045 = vld [vmem:[%s6 + $0x18] sm:$0xff]
      %v1046 = vld [vmem:[%s7] sm:$0xff]
      %v1047 = vld [vmem:[%s7 + $0x8] sm:$0xff]
      %v1048 = vld [vmem:[%s7 + $0x10] sm:$0xff]
      %v1049 = vld [vmem:[%s7 + $0x18] sm:$0xff]
      %1050 = vmatprep.subr.mxu0 0.0
      %1051 = vmatpush1.msra.mxu0 %v1046
      %1052 = vmatprep.subr.mxu0 0.0
      %1053 = vmatpush1.msra.mxu0 %v1047
      %1054 = vmatprep.subr.mxu0 0.0
      %1055 = vmatpush1.msra.mxu0 %v1048
      %1056 = vmatprep.subr.mxu0 0.0
      %1057 = vmatpush1.msra.mxu0 %v1049
      %1058 = vmatprep.subr.mxu0 0.0
      %1059 = vmatpush1.msra.mxu0 0.0
      %1060 = vmatprep.subr.mxu0 0.0
      %1061 = vmatpush1.msra.mxu0 0.0
      %1062 = vmatprep.subr.mxu0 0.0
      %1063 = vmatpush1.msra.mxu0 0.0
      %1064 = vmatprep.subr.mxu0 0.0
      %1065 = vmatpush1.msra.mxu0 0.0
      %1066 = vmatprep.subr.mxu0 0.0
      %1067 = vmatpush1.msra.mxu0 0.0
      %1068 = vmatprep.subr.mxu0 0.0
      %1069 = vmatpush1.msra.mxu0 0.0
      %1070 = vmatprep.subr.mxu0 0.0
      %1071 = vmatpush1.msra.mxu0 0.0
      %1072 = vmatprep.subr.mxu0 0.0
      %1073 = vmatpush1.msra.mxu0 0.0
      %1074 = vmatprep.subr.mxu0 0.0
      %1075 = vmatpush1.msra.mxu0 0.0
      %1076 = vmatprep.subr.mxu0 0.0
      %1077 = vmatpush1.msra.mxu0 0.0
      %1078 = vmatprep.subr.mxu0 0.0
      %1079 = vmatpush1.msra.mxu0 0.0
      %1080 = vmatprep.subr.mxu0 0.0
      %1081 = vmatpush1.msra.mxu0 0.0
      %1082 = vmatprep.subr.mxu0 0.0
      %1083 = vmatpush1.msra.mxu0 0.0
      %1084 = vmatprep.subr.mxu0 0.0
      %1085 = vmatpush1.msra.mxu0 0.0
      %1086 = vmatprep.subr.mxu0 0.0
      %1087 = vmatpush1.msra.mxu0 0.0
      %1088 = vmatprep.subr.mxu0 0.0
      %1089 = vmatpush1.msra.mxu0 0.0
      %1090 = vmatprep.subr.mxu0 0.0
      %1091 = vmatpush1.msra.mxu0 0.0
      %1092 = vmatprep.subr.mxu0 0.0
      %1093 = vmatpush1.msra.mxu0 0.0
      %1094 = vmatprep.subr.mxu0 0.0
      %1095 = vmatpush1.msra.mxu0 0.0
      %1096 = vmatprep.subr.mxu0 0.0
      %1097 = vmatpush1.msra.mxu0 0.0
      %1098 = vmatprep.subr.mxu0 0.0
      %1099 = vmatpush1.msra.mxu0 0.0
      %1100 = vmatprep.subr.mxu0 0.0
      %1101 = vmatpush1.msra.mxu0 0.0
      %1102 = vmatprep.subr.mxu0 0.0
      %1103 = vmatpush1.msra.mxu0 0.0
      %1104 = vmatprep.subr.mxu0 0.0
      %1105 = vmatpush1.msra.mxu0 0.0
      %1106 = vmatprep.subr.mxu0 0.0
      %1107 = vmatpush1.msra.mxu0 0.0
      %1108 = vmatprep.subr.mxu0 0.0
      %1109 = vmatpush1.msra.mxu0 0.0
      %1110 = vmatprep.subr.mxu0 0.0
      %1111 = vmatpush1.msra.mxu0 0.0
      %1112 = vmatprep.subr.mxu0 0.0
      %1113 = vmatpush1.msra.mxu0 0.0
      %1114 = vmatprep.mubr.f32.mxu0 0.0
      %1115 = vmatmul.mubr.f32.gmra.mrb[0].mxu0 %v657
      %v1116 = vpop.f32.mrb[0].mxu0
      %v1117 = vadd.f32 0.0, %v1116
      %v1118 = vpop.f32.mrb[0].mxu0
      %1119 = vmatprep.mubr.f32.mxu0 0.0
      %1120 = vmatmul.mubr.f32.gmra.mrb[0].mxu0 %v660
      %v1121 = vpop.f32.mrb[0].mxu0
      %v1122 = vadd.f32 0.0, %v1121
      %v1123 = vpop.f32.mrb[0].mxu0
      %1124 = vmatprep.mubr.f32.mxu0 0.0
      %1125 = vmatmul.mubr.f32.gmra.mrb[0].mxu0 %v663
      %v1126 = vpop.f32.mrb[0].mxu0
      %v1127 = vadd.f32 0.0, %v1126
      %v1128 = vpop.f32.mrb[0].mxu0
      %1129 = vmatprep.mubr.f32.mxu0 0.0
      %1130 = vmatmul.mubr.f32.gmra.mrb[0].mxu0 %v666
      %v1131 = vpop.f32.mrb[0].mxu0
      %v1132 = vadd.f32 0.0, %v1131
      %v1133 = vpop.f32.mrb[0].mxu0
      %1134 = vmatprep.mubr.f32.mxu0 0.0
      %1135 = vmatmul.mubr.f32.gmra.mrb[0].mxu0 %v669
      %v1136 = vpop.f32.mrb[0].mxu0
      %v1137 = vadd.f32 0.0, %v1136
      %v1138 = vpop.f32.mrb[0].mxu0
      %1139 = vmatprep.mubr.f32.mxu0 0.0
      %1140 = vmatmul.mubr.f32.gmra.mrb[0].mxu0 %v672
      %v1141 = vpop.f32.mrb[0].mxu0
      %v1142 = vadd.f32 0.0, %v1141
      %v1143 = vpop.f32.mrb[0].mxu0
      %1144 = vmatprep.mubr.f32.mxu0 0.0
      %1145 = vmatmul.mubr.f32.gmra.mrb[0].mxu0 %v675
      %v1146 = vpop.f32.mrb[0].mxu0
      %v1147 = vadd.f32 0.0, %v1146
      %v1148 = vpop.f32.mrb[0].mxu0
      %1149 = vmatprep.mubr.f32.mxu0 0.0
      %1150 = vmatmul.mubr.f32.gmra.mrb[0].mxu0 %v678
      %v1151 = vpop.f32.mrb[0].mxu0
      %v1152 = vadd.f32 0.0, %v1151
      %v1153 = vpop.f32.mrb[0].mxu0
      %1154 = vmatprep.mubr.f32.mxu0 0.0
      %1155 = vmatmul.mubr.f32.gmra.mrb[0].mxu0 %v681
      %v1156 = vpop.f32.mrb[0].mxu0
      %v1157 = vadd.f32 0.0, %v1156
      %v1158 = vpop.f32.mrb[0].mxu0
      %1159 = vmatprep.mubr.f32.mxu0 0.0
      %1160 = vmatmul.mubr.f32.gmra.mrb[0].mxu0 %v684
      %v1161 = vpop.f32.mrb[0].mxu0
      %v1162 = vadd.f32 0.0, %v1161
      %v1163 = vpop.f32.mrb[0].mxu0
      %1164 = vmatprep.mubr.f32.mxu0 0.0
      %1165 = vmatmul.mubr.f32.gmra.mrb[0].mxu0 %v687
      %v1166 = vpop.f32.mrb[0].mxu0
      %v1167 = vadd.f32 0.0, %v1166
      %v1168 = vpop.f32.mrb[0].mxu0
      %1169 = vmatprep.mubr.f32.mxu0 0.0
      %1170 = vmatmul.mubr.f32.gmra.mrb[0].mxu0 %v690
      %v1171 = vpop.f32.mrb[0].mxu0
      %v1172 = vadd.f32 0.0, %v1171
      %v1173 = vpop.f32.mrb[0].mxu0
      %1174 = vmatprep.mubr.f32.mxu0 0.0
      %1175 = vmatmul.mubr.f32.gmra.mrb[0].mxu0 %v693
      %v1176 = vpop.f32.mrb[0].mxu0
      %v1177 = vadd.f32 0.0, %v1176
      %v1178 = vpop.f32.mrb[0].mxu0
      %1179 = vmatprep.mubr.f32.mxu0 0.0
      %1180 = vmatmul.mubr.f32.gmra.mrb[0].mxu0 %v696
      %v1181 = vpop.f32.mrb[0].mxu0
      %v1182 = vadd.f32 0.0, %v1181
      %v1183 = vpop.f32.mrb[0].mxu0
      %1184 = vmatprep.mubr.f32.mxu0 0.0
      %1185 = vmatmul.mubr.f32.gmra.mrb[0].mxu0 %v699
      %v1186 = vpop.f32.mrb[0].mxu0
      %v1187 = vadd.f32 0.0, %v1186
      %v1188 = vpop.f32.mrb[0].mxu0
      %1189 = vmatprep.mubr.f32.mxu0 0.0
      %1190 = vmatmul.mubr.f32.gmra.mrb[0].mxu0 %v702
      %v1191 = vpop.f32.mrb[0].mxu0
      %v1192 = vadd.f32 0.0, %v1191
      %v1193 = vpop.f32.mrb[0].mxu0
      %1194 = vdwg.mxu0
      %1195 = vmatprep.subr.mxu0 0.0
      %1196 = vmatpush1.msra.mxu0 %v1042
      %1197 = vmatprep.subr.mxu0 0.0
      %1198 = vmatpush1.msra.mxu0 %v1043
      %1199 = vmatprep.subr.mxu0 0.0
      %1200 = vmatpush1.msra.mxu0 %v1044
      %1201 = vmatprep.subr.mxu0 0.0
      %1202 = vmatpush1.msra.mxu0 %v1045
      %1203 = vmatprep.subr.mxu0 0.0
      %1204 = vmatpush1.msra.mxu0 0.0
      %1205 = vmatprep.subr.mxu0 0.0
      %1206 = vmatpush1.msra.mxu0 0.0
      %1207 = vmatprep.subr.mxu0 0.0
      %1208 = vmatpush1.msra.mxu0 0.0
      %1209 = vmatprep.subr.mxu0 0.0
      %1210 = vmatpush1.msra.mxu0 0.0
      %1211 = vmatprep.subr.mxu0 0.0
      %1212 = vmatpush1.msra.mxu0 0.0
      %1213 = vmatprep.subr.mxu0 0.0
      %1214 = vmatpush1.msra.mxu0 0.0
      %1215 = vmatprep.subr.mxu0 0.0
      %1216 = vmatpush1.msra.mxu0 0.0
      %1217 = vmatprep.subr.mxu0 0.0
      %1218 = vmatpush1.msra.mxu0 0.0
      %1219 = vmatprep.subr.mxu0 0.0
      %1220 = vmatpush1.msra.mxu0 0.0
      %1221 = vmatprep.subr.mxu0 0.0
      %1222 = vmatpush1.msra.mxu0 0.0
      %1223 = vmatprep.subr.mxu0 0.0
      %1224 = vmatpush1.msra.mxu0 0.0
      %1225 = vmatprep.subr.mxu0 0.0
      %1226 = vmatpush1.msra.mxu0 0.0
      %1227 = vmatprep.subr.mxu0 0.0
      %1228 = vmatpush1.msra.mxu0 0.0
      %1229 = vmatprep.subr.mxu0 0.0
      %1230 = vmatpush1.msra.mxu0 0.0
      %1231 = vmatprep.subr.mxu0 0.0
      %1232 = vmatpush1.msra.mxu0 0.0
      %1233 = vmatprep.subr.mxu0 0.0
      %1234 = vmatpush1.msra.mxu0 0.0
      %1235 = vmatprep.subr.mxu0 0.0
      %1236 = vmatpush1.msra.mxu0 0.0
      %1237 = vmatprep.subr.mxu0 0.0
      %1238 = vmatpush1.msra.mxu0 0.0
      %1239 = vmatprep.subr.mxu0 0.0
      %1240 = vmatpush1.msra.mxu0 0.0
      %1241 = vmatprep.subr.mxu0 0.0
      %1242 = vmatpush1.msra.mxu0 0.0
      %1243 = vmatprep.subr.mxu0 0.0
      %1244 = vmatpush1.msra.mxu0 0.0
      %1245 = vmatprep.subr.mxu0 0.0
      %1246 = vmatpush1.msra.mxu0 0.0
      %1247 = vmatprep.subr.mxu0 0.0
      %1248 = vmatpush1.msra.mxu0 0.0
      %1249 = vmatprep.subr.mxu0 0.0
      %1250 = vmatpush1.msra.mxu0 0.0
      %1251 = vmatprep.subr.mxu0 0.0
      %1252 = vmatpush1.msra.mxu0 0.0
      %1253 = vmatprep.subr.mxu0 0.0
      %1254 = vmatpush1.msra.mxu0 0.0
      %1255 = vmatprep.subr.mxu0 0.0
      %1256 = vmatpush1.msra.mxu0 0.0
      %1257 = vmatprep.subr.mxu0 0.0
      %1258 = vmatpush1.msra.mxu0 0.0
      %1259 = vmatprep.mubr.f32.mxu0 0.0
      %1260 = vmatmul.mubr.f32.gmra.mrb[0].mxu0 %v850
      %v1261 = vpop.f32.mrb[0].mxu0
      %v1262 = vadd.f32 %v1117, %v1261
      %v1263 = vpop.f32.mrb[0].mxu0
      %1264 = vmatprep.mubr.f32.mxu0 0.0
      %1265 = vmatmul.mubr.f32.gmra.mrb[0].mxu0 %v853
      %v1266 = vpop.f32.mrb[0].mxu0
      %v1267 = vadd.f32 %v1122, %v1266
      %v1268 = vpop.f32.mrb[0].mxu0
      %1269 = vmatprep.mubr.f32.mxu0 0.0
      %1270 = vmatmul.mubr.f32.gmra.mrb[0].mxu0 %v856
      %v1271 = vpop.f32.mrb[0].mxu0
      %v1272 = vadd.f32 %v1127, %v1271
      %v1273 = vpop.f32.mrb[0].mxu0
      %1274 = vmatprep.mubr.f32.mxu0 0.0
      %1275 = vmatmul.mubr.f32.gmra.mrb[0].mxu0 %v859
      %v1276 = vpop.f32.mrb[0].mxu0
      %v1277 = vadd.f32 %v1132, %v1276
      %v1278 = vpop.f32.mrb[0].mxu0
      %1279 = vmatprep.mubr.f32.mxu0 0.0
      %1280 = vmatmul.mubr.f32.gmra.mrb[0].mxu0 %v862
      %v1281 = vpop.f32.mrb[0].mxu0
      %v1282 = vadd.f32 %v1137, %v1281
      %v1283 = vpop.f32.mrb[0].mxu0
      %1284 = vmatprep.mubr.f32.mxu0 0.0
      %1285 = vmatmul.mubr.f32.gmra.mrb[0].mxu0 %v865
      %v1286 = vpop.f32.mrb[0].mxu0
      %v1287 = vadd.f32 %v1142, %v1286
      %v1288 = vpop.f32.mrb[0].mxu0
      %1289 = vmatprep.mubr.f32.mxu0 0.0
      %1290 = vmatmul.mubr.f32.gmra.mrb[0].mxu0 %v868
      %v1291 = vpop.f32.mrb[0].mxu0
      %v1292 = vadd.f32 %v1147, %v1291
      %v1293 = vpop.f32.mrb[0].mxu0
      %1294 = vmatprep.mubr.f32.mxu0 0.0
      %1295 = vmatmul.mubr.f32.gmra.mrb[0].mxu0 %v871
      %v1296 = vpop.f32.mrb[0].mxu0
      %v1297 = vadd.f32 %v1152, %v1296
      %v1298 = vpop.f32.mrb[0].mxu0
      %1299 = vmatprep.mubr.f32.mxu0 0.0
      %1300 = vmatmul.mubr.f32.gmra.mrb[0].mxu0 %v874
      %v1301 = vpop.f32.mrb[0].mxu0
      %v1302 = vadd.f32 %v1157, %v1301
      %v1303 = vpop.f32.mrb[0].mxu0
      %1304 = vmatprep.mubr.f32.mxu0 0.0
      %1305 = vmatmul.mubr.f32.gmra.mrb[0].mxu0 %v877
      %v1306 = vpop.f32.mrb[0].mxu0
      %v1307 = vadd.f32 %v1162, %v1306
      %v1308 = vpop.f32.mrb[0].mxu0
      %1309 = vmatprep.mubr.f32.mxu0 0.0
      %1310 = vmatmul.mubr.f32.gmra.mrb[0].mxu0 %v880
      %v1311 = vpop.f32.mrb[0].mxu0
      %v1312 = vadd.f32 %v1167, %v1311
      %v1313 = vpop.f32.mrb[0].mxu0
      %1314 = vmatprep.mubr.f32.mxu0 0.0
      %1315 = vmatmul.mubr.f32.gmra.mrb[0].mxu0 %v883
      %v1316 = vpop.f32.mrb[0].mxu0
      %v1317 = vadd.f32 %v1172, %v1316
      %v1318 = vpop.f32.mrb[0].mxu0
      %1319 = vmatprep.mubr.f32.mxu0 0.0
      %1320 = vmatmul.mubr.f32.gmra.mrb[0].mxu0 %v886
      %v1321 = vpop.f32.mrb[0].mxu0
      %v1322 = vadd.f32 %v1177, %v1321
      %v1323 = vpop.f32.mrb[0].mxu0
      %1324 = vmatprep.mubr.f32.mxu0 0.0
      %1325 = vmatmul.mubr.f32.gmra.mrb[0].mxu0 %v889
      %v1326 = vpop.f32.mrb[0].mxu0
      %v1327 = vadd.f32 %v1182, %v1326
      %v1328 = vpop.f32.mrb[0].mxu0
      %1329 = vmatprep.mubr.f32.mxu0 0.0
      %1330 = vmatmul.mubr.f32.gmra.mrb[0].mxu0 %v892
      %v1331 = vpop.f32.mrb[0].mxu0
      %v1332 = vadd.f32 %v1187, %v1331
      %v1333 = vpop.f32.mrb[0].mxu0
      %1334 = vmatprep.mubr.f32.mxu0 0.0
      %1335 = vmatmul.mubr.f32.gmra.mrb[0].mxu0 %v895
      %v1336 = vpop.f32.mrb[0].mxu0
      %v1337 = vadd.f32 %v1192, %v1336
      %v1338 = vpop.f32.mrb[0].mxu0
      %1339 = vdwg.mxu0
      %vm1340 = vcmp.gt.f32.partialorder %v964, 0.0
      %vm1341 = vcmp.gt.f32.partialorder %v969, 0.0
      %vm1342 = vcmp.gt.f32.partialorder %v974, 0.0
      %vm1343 = vcmp.gt.f32.partialorder %v979, 0.0
      %vm1344 = vcmp.gt.f32.partialorder %v984, 0.0
      %vm1345 = vcmp.gt.f32.partialorder %v989, 0.0
      %vm1346 = vcmp.gt.f32.partialorder %v994, 0.0
      %vm1347 = vcmp.gt.f32.partialorder %v999, 0.0
      %vm1348 = vcmp.gt.f32.partialorder %v1004, 0.0
      %vm1349 = vcmp.gt.f32.partialorder %v1009, 0.0
      %vm1350 = vcmp.gt.f32.partialorder %v1014, 0.0
      %vm1351 = vcmp.gt.f32.partialorder %v1019, 0.0
      %vm1352 = vcmp.gt.f32.partialorder %v1024, 0.0
      %vm1353 = vcmp.gt.f32.partialorder %v1029, 0.0
      %vm1354 = vcmp.gt.f32.partialorder %v1034, 0.0
      %vm1355 = vcmp.gt.f32.partialorder %v1039, 0.0
      %v1356 = vmul.f32 %v964, 0.2
      %v1357 = vmul.f32 %v969, 0.2
      %v1358 = vmul.f32 %v974, 0.2
      %v1359 = vmul.f32 %v979, 0.2
      %v1360 = vmul.f32 %v984, 0.2
      %v1361 = vmul.f32 %v989, 0.2
      %v1362 = vmul.f32 %v994, 0.2
      %v1363 = vmul.f32 %v999, 0.2
      %v1364 = vmul.f32 %v1004, 0.2
      %v1365 = vmul.f32 %v1009, 0.2
      %v1366 = vmul.f32 %v1014, 0.2
      %v1367 = vmul.f32 %v1019, 0.2
      %v1368 = vmul.f32 %v1024, 0.2
      %v1369 = vmul.f32 %v1029, 0.2
      %v1370 = vmul.f32 %v1034, 0.2
      %v1371 = vmul.f32 %v1039, 0.2
      %v1372 = vsel %vm1340, %v964, %v1356
      %v1373 = vsel %vm1341, %v969, %v1357
      %v1374 = vsel %vm1342, %v974, %v1358
      %v1375 = vsel %vm1343, %v979, %v1359
      %v1376 = vsel %vm1344, %v984, %v1360
      %v1377 = vsel %vm1345, %v989, %v1361
      %v1378 = vsel %vm1346, %v994, %v1362
      %v1379 = vsel %vm1347, %v999, %v1363
      %v1380 = vsel %vm1348, %v1004, %v1364
      %v1381 = vsel %vm1349, %v1009, %v1365
      %v1382 = vsel %vm1350, %v1014, %v1366
      %v1383 = vsel %vm1351, %v1019, %v1367
      %v1384 = vsel %vm1352, %v1024, %v1368
      %v1385 = vsel %vm1353, %v1029, %v1369
      %v1386 = vsel %vm1354, %v1034, %v1370
      %v1387 = vsel %vm1355, %v1039, %v1371
      %vm1388 = vcmp.gt.f32.partialorder %v1262, 0.0
      %vm1389 = vcmp.gt.f32.partialorder %v1267, 0.0
      %vm1390 = vcmp.gt.f32.partialorder %v1272, 0.0
      %vm1391 = vcmp.gt.f32.partialorder %v1277, 0.0
      %vm1392 = vcmp.gt.f32.partialorder %v1282, 0.0
      %vm1393 = vcmp.gt.f32.partialorder %v1287, 0.0
      %vm1394 = vcmp.gt.f32.partialorder %v1292, 0.0
      %vm1395 = vcmp.gt.f32.partialorder %v1297, 0.0
      %vm1396 = vcmp.gt.f32.partialorder %v1302, 0.0
      %vm1397 = vcmp.gt.f32.partialorder %v1307, 0.0
      %vm1398 = vcmp.gt.f32.partialorder %v1312, 0.0
      %vm1399 = vcmp.gt.f32.partialorder %v1317, 0.0
      %vm1400 = vcmp.gt.f32.partialorder %v1322, 0.0
      %vm1401 = vcmp.gt.f32.partialorder %v1327, 0.0
      %vm1402 = vcmp.gt.f32.partialorder %v1332, 0.0
      %vm1403 = vcmp.gt.f32.partialorder %v1337, 0.0
      %v1404 = vmul.f32 %v1262, 0.2
      %v1405 = vmul.f32 %v1267, 0.2
      %v1406 = vmul.f32 %v1272, 0.2
      %v1407 = vmul.f32 %v1277, 0.2
      %v1408 = vmul.f32 %v1282, 0.2
      %v1409 = vmul.f32 %v1287, 0.2
      %v1410 = vmul.f32 %v1292, 0.2
      %v1411 = vmul.f32 %v1297, 0.2
      %v1412 = vmul.f32 %v1302, 0.2
      %v1413 = vmul.f32 %v1307, 0.2
      %v1414 = vmul.f32 %v1312, 0.2
      %v1415 = vmul.f32 %v1317, 0.2
      %v1416 = vmul.f32 %v1322, 0.2
      %v1417 = vmul.f32 %v1327, 0.2
      %v1418 = vmul.f32 %v1332, 0.2
      %v1419 = vmul.f32 %v1337, 0.2
      %v1420 = vsel %vm1388, %v1262, %v1404
      %v1421 = vsel %vm1389, %v1267, %v1405
      %v1422 = vsel %vm1390, %v1272, %v1406
      %v1423 = vsel %vm1391, %v1277, %v1407
      %v1424 = vsel %vm1392, %v1282, %v1408
      %v1425 = vsel %vm1393, %v1287, %v1409
      %v1426 = vsel %vm1394, %v1292, %v1410
      %v1427 = vsel %vm1395, %v1297, %v1411
      %v1428 = vsel %vm1396, %v1302, %v1412
      %v1429 = vsel %vm1397, %v1307, %v1413
      %v1430 = vsel %vm1398, %v1312, %v1414
      %v1431 = vsel %vm1399, %v1317, %v1415
      %v1432 = vsel %vm1400, %v1322, %v1416
      %v1433 = vsel %vm1401, %v1327, %v1417
      %v1434 = vsel %vm1402, %v1332, %v1418
      %v1435 = vsel %vm1403, %v1337, %v1419
      %v1436 = vmax.f32 %v1372, %v1420
      %v1437 = vmax.f32 %v1373, %v1421
      %v1438 = vmax.f32 %v1374, %v1422
      %v1439 = vmax.f32 %v1375, %v1423
      %v1440 = vmax.f32 %v1376, %v1424
      %v1441 = vmax.f32 %v1377, %v1425
      %v1442 = vmax.f32 %v1378, %v1426
      %v1443 = vmax.f32 %v1379, %v1427
      %v1444 = vmax.f32 %v1380, %v1428
      %v1445 = vmax.f32 %v1381, %v1429
      %v1446 = vmax.f32 %v1382, %v1430
      %v1447 = vmax.f32 %v1383, %v1431
      %v1448 = vmax.f32 %v1384, %v1432
      %v1449 = vmax.f32 %v1385, %v1433
      %v1450 = vmax.f32 %v1386, %v1434
      %v1451 = vmax.f32 %v1387, %v1435
      %v1452 = vsub.f32 %v1372, %v1436
      %v1453 = vsub.f32 %v1373, %v1437
      %v1454 = vsub.f32 %v1374, %v1438
      %v1455 = vsub.f32 %v1375, %v1439
      %v1456 = vsub.f32 %v1376, %v1440
      %v1457 = vsub.f32 %v1377, %v1441
      %v1458 = vsub.f32 %v1378, %v1442
      %v1459 = vsub.f32 %v1379, %v1443
      %v1460 = vsub.f32 %v1380, %v1444
      %v1461 = vsub.f32 %v1381, %v1445
      %v1462 = vsub.f32 %v1382, %v1446
      %v1463 = vsub.f32 %v1383, %v1447
      %v1464 = vsub.f32 %v1384, %v1448
      %v1465 = vsub.f32 %v1385, %v1449
      %v1466 = vsub.f32 %v1386, %v1450
      %v1467 = vsub.f32 %v1387, %v1451
      %v1468 = vmul.f32 %v1452, 1.442695
      %v1469 = vpow.pop %v1468
      %v1470 = vmul.f32 %v1453, 1.442695
      %v1471 = vpow.pop %v1470
      %v1472 = vmul.f32 %v1454, 1.442695
      %v1473 = vpow.pop %v1472
      %v1474 = vmul.f32 %v1455, 1.442695
      %v1475 = vpow.pop %v1474
      %v1476 = vmul.f32 %v1456, 1.442695
      %v1477 = vpow.pop %v1476
      %v1478 = vmul.f32 %v1457, 1.442695
      %v1479 = vpow.pop %v1478
      %v1480 = vmul.f32 %v1458, 1.442695
      %v1481 = vpow.pop %v1480
      %v1482 = vmul.f32 %v1459, 1.442695
      %v1483 = vpow.pop %v1482
      %v1484 = vmul.f32 %v1460, 1.442695
      %v1485 = vpow.pop %v1484
      %v1486 = vmul.f32 %v1461, 1.442695
      %v1487 = vpow.pop %v1486
      %v1488 = vmul.f32 %v1462, 1.442695
      %v1489 = vpow.pop %v1488
      %v1490 = vmul.f32 %v1463, 1.442695
      %v1491 = vpow.pop %v1490
      %v1492 = vmul.f32 %v1464, 1.442695
      %v1493 = vpow.pop %v1492
      %v1494 = vmul.f32 %v1465, 1.442695
      %v1495 = vpow.pop %v1494
      %v1496 = vmul.f32 %v1466, 1.442695
      %v1497 = vpow.pop %v1496
      %v1498 = vmul.f32 %v1467, 1.442695
      %v1499 = vpow.pop %v1498
      %v1500 = vsub.f32 %v1420, %v1436
      %v1501 = vsub.f32 %v1421, %v1437
      %v1502 = vsub.f32 %v1422, %v1438
      %v1503 = vsub.f32 %v1423, %v1439
      %v1504 = vsub.f32 %v1424, %v1440
      %v1505 = vsub.f32 %v1425, %v1441
      %v1506 = vsub.f32 %v1426, %v1442
      %v1507 = vsub.f32 %v1427, %v1443
      %v1508 = vsub.f32 %v1428, %v1444
      %v1509 = vsub.f32 %v1429, %v1445
      %v1510 = vsub.f32 %v1430, %v1446
      %v1511 = vsub.f32 %v1431, %v1447
      %v1512 = vsub.f32 %v1432, %v1448
      %v1513 = vsub.f32 %v1433, %v1449
      %v1514 = vsub.f32 %v1434, %v1450
      %v1515 = vsub.f32 %v1435, %v1451
      %v1516 = vmul.f32 %v1500, 1.442695
      %v1517 = vpow.pop %v1516
      %v1518 = vmul.f32 %v1501, 1.442695
      %v1519 = vpow.pop %v1518
      %v1520 = vmul.f32 %v1502, 1.442695
      %v1521 = vpow.pop %v1520
      %v1522 = vmul.f32 %v1503, 1.442695
      %v1523 = vpow.pop %v1522
      %v1524 = vmul.f32 %v1504, 1.442695
      %v1525 = vpow.pop %v1524
      %v1526 = vmul.f32 %v1505, 1.442695
      %v1527 = vpow.pop %v1526
      %v1528 = vmul.f32 %v1506, 1.442695
      %v1529 = vpow.pop %v1528
      %v1530 = vmul.f32 %v1507, 1.442695
      %v1531 = vpow.pop %v1530
      %v1532 = vmul.f32 %v1508, 1.442695
      %v1533 = vpow.pop %v1532
      %v1534 = vmul.f32 %v1509, 1.442695
      %v1535 = vpow.pop %v1534
      %v1536 = vmul.f32 %v1510, 1.442695
      %v1537 = vpow.pop %v1536
      %v1538 = vmul.f32 %v1511, 1.442695
      %v1539 = vpow.pop %v1538
      %v1540 = vmul.f32 %v1512, 1.442695
      %v1541 = vpow.pop %v1540
      %v1542 = vmul.f32 %v1513, 1.442695
      %v1543 = vpow.pop %v1542
      %v1544 = vmul.f32 %v1514, 1.442695
      %v1545 = vpow.pop %v1544
      %v1546 = vmul.f32 %v1515, 1.442695
      %v1547 = vpow.pop %v1546
      %v1548 = vadd.f32 %v1469, %v1517
      %v1549 = vadd.f32 %v1471, %v1519
      %v1550 = vadd.f32 %v1473, %v1521
      %v1551 = vadd.f32 %v1475, %v1523
      %v1552 = vadd.f32 %v1477, %v1525
      %v1553 = vadd.f32 %v1479, %v1527
      %v1554 = vadd.f32 %v1481, %v1529
      %v1555 = vadd.f32 %v1483, %v1531
      %v1556 = vadd.f32 %v1485, %v1533
      %v1557 = vadd.f32 %v1487, %v1535
      %v1558 = vadd.f32 %v1489, %v1537
      %v1559 = vadd.f32 %v1491, %v1539
      %v1560 = vadd.f32 %v1493, %v1541
      %v1561 = vadd.f32 %v1495, %v1543
      %v1562 = vadd.f32 %v1497, %v1545
      %v1563 = vadd.f32 %v1499, %v1547
      %v1564 = vrcp.pop %v1548
      %v1565 = vrcp.pop %v1549
      %v1566 = vrcp.pop %v1550
      %v1567 = vrcp.pop %v1551
      %v1568 = vrcp.pop %v1552
      %v1569 = vrcp.pop %v1553
      %v1570 = vrcp.pop %v1554
      %v1571 = vrcp.pop %v1555
      %v1572 = vrcp.pop %v1556
      %v1573 = vrcp.pop %v1557
      %v1574 = vrcp.pop %v1558
      %v1575 = vrcp.pop %v1559
      %v1576 = vrcp.pop %v1560
      %v1577 = vrcp.pop %v1561
      %v1578 = vrcp.pop %v1562
      %v1579 = vrcp.pop %v1563
      %v1580 = vmul.f32 %v1469, %v1564
      %v1581 = vmul.f32 %v1471, %v1565
      %v1582 = vmul.f32 %v1473, %v1566
      %v1583 = vmul.f32 %v1475, %v1567
      %v1584 = vmul.f32 %v1477, %v1568
      %v1585 = vmul.f32 %v1479, %v1569
      %v1586 = vmul.f32 %v1481, %v1570
      %v1587 = vmul.f32 %v1483, %v1571
      %v1588 = vmul.f32 %v1485, %v1572
      %v1589 = vmul.f32 %v1487, %v1573
      %v1590 = vmul.f32 %v1489, %v1574
      %v1591 = vmul.f32 %v1491, %v1575
      %v1592 = vmul.f32 %v1493, %v1576
      %v1593 = vmul.f32 %v1495, %v1577
      %v1594 = vmul.f32 %v1497, %v1578
      %v1595 = vmul.f32 %v1499, %v1579
      %v1596 = vmul.f32 %v553, %v1580
      %v1597 = vmul.f32 %v558, %v1581
      %v1598 = vmul.f32 %v563, %v1582
      %v1599 = vmul.f32 %v568, %v1583
      %v1600 = vmul.f32 %v573, %v1584
      %v1601 = vmul.f32 %v578, %v1585
      %v1602 = vmul.f32 %v583, %v1586
      %v1603 = vmul.f32 %v588, %v1587
      %v1604 = vmul.f32 %v593, %v1588
      %v1605 = vmul.f32 %v598, %v1589
      %v1606 = vmul.f32 %v603, %v1590
      %v1607 = vmul.f32 %v608, %v1591
      %v1608 = vmul.f32 %v613, %v1592
      %v1609 = vmul.f32 %v618, %v1593
      %v1610 = vmul.f32 %v623, %v1594
      %v1611 = vmul.f32 %v628, %v1595
      %v1612 = vmul.f32 %v1517, %v1564
      %v1613 = vmul.f32 %v1519, %v1565
      %v1614 = vmul.f32 %v1521, %v1566
      %v1615 = vmul.f32 %v1523, %v1567
      %v1616 = vmul.f32 %v1525, %v1568
      %v1617 = vmul.f32 %v1527, %v1569
      %v1618 = vmul.f32 %v1529, %v1570
      %v1619 = vmul.f32 %v1531, %v1571
      %v1620 = vmul.f32 %v1533, %v1572
      %v1621 = vmul.f32 %v1535, %v1573
      %v1622 = vmul.f32 %v1537, %v1574
      %v1623 = vmul.f32 %v1539, %v1575
      %v1624 = vmul.f32 %v1541, %v1576
      %v1625 = vmul.f32 %v1543, %v1577
      %v1626 = vmul.f32 %v1545, %v1578
      %v1627 = vmul.f32 %v1547, %v1579
      %v1628 = vmul.f32 %v631, %v1612
      %v1629 = vmul.f32 %v632, %v1613
      %v1630 = vmul.f32 %v633, %v1614
      %v1631 = vmul.f32 %v634, %v1615
      %v1632 = vmul.f32 %v635, %v1616
      %v1633 = vmul.f32 %v636, %v1617
      %v1634 = vmul.f32 %v637, %v1618
      %v1635 = vmul.f32 %v638, %v1619
      %v1636 = vmul.f32 %v639, %v1620
      %v1637 = vmul.f32 %v640, %v1621
      %v1638 = vmul.f32 %v641, %v1622
      %v1639 = vmul.f32 %v642, %v1623
      %v1640 = vmul.f32 %v643, %v1624
      %v1641 = vmul.f32 %v644, %v1625
      %v1642 = vmul.f32 %v645, %v1626
      %v1643 = vmul.f32 %v646, %v1627
      %v1644 = vld [vmem:[%s8] sm:$0xff]
      %v1645 = vld [vmem:[%s8 + $0x8] sm:$0xff]
      %v1646 = vld [vmem:[%s8 + $0x10] sm:$0xff]
      %v1647 = vld [vmem:[%s8 + $0x18] sm:$0xff]
      %v1648 = vld [vmem:[%s9] sm:$0xff]
      %v1649 = vld [vmem:[%s9 + $0x8] sm:$0xff]
      %v1650 = vld [vmem:[%s9 + $0x10] sm:$0xff]
      %v1651 = vld [vmem:[%s9 + $0x18] sm:$0xff]
      %v1653 = vsel %vm655, %v1628, 0
      %v1656 = vsel %vm655, %v1629, 0
      %v1659 = vsel %vm655, %v1630, 0
      %v1662 = vsel %vm655, %v1631, 0
      %v1665 = vsel %vm655, %v1632, 0
      %v1668 = vsel %vm655, %v1633, 0
      %v1671 = vsel %vm655, %v1634, 0
      %v1674 = vsel %vm655, %v1635, 0
      %v1677 = vsel %vm655, %v1636, 0
      %v1680 = vsel %vm655, %v1637, 0
      %v1683 = vsel %vm655, %v1638, 0
      %v1686 = vsel %vm655, %v1639, 0
      %v1689 = vsel %vm655, %v1640, 0
      %v1692 = vsel %vm655, %v1641, 0
      %v1695 = vsel %vm655, %v1642, 0
      %v1698 = vsel %vm655, %v1643, 0
      %1700 = vmatprep.subr.mxu0 0.0
      %1701 = vmatpush1.msra.mxu0 %v1648
      %1702 = vmatprep.subr.mxu0 0.0
      %1703 = vmatpush1.msra.mxu0 %v1649
      %1704 = vmatprep.subr.mxu0 0.0
      %1705 = vmatpush1.msra.mxu0 %v1650
      %1706 = vmatprep.subr.mxu0 0.0
      %1707 = vmatpush1.msra.mxu0 %v1651
      %1708 = vmatprep.subr.mxu0 0.0
      %1709 = vmatpush1.msra.mxu0 0.0
      %1710 = vmatprep.subr.mxu0 0.0
      %1711 = vmatpush1.msra.mxu0 0.0
      %1712 = vmatprep.subr.mxu0 0.0
      %1713 = vmatpush1.msra.mxu0 0.0
      %1714 = vmatprep.subr.mxu0 0.0
      %1715 = vmatpush1.msra.mxu0 0.0
      %1716 = vmatprep.subr.mxu0 0.0
      %1717 = vmatpush1.msra.mxu0 0.0
      %1718 = vmatprep.subr.mxu0 0.0
      %1719 = vmatpush1.msra.mxu0 0.0
      %1720 = vmatprep.subr.mxu0 0.0
      %1721 = vmatpush1.msra.mxu0 0.0
      %1722 = vmatprep.subr.mxu0 0.0
      %1723 = vmatpush1.msra.mxu0 0.0
      %1724 = vmatprep.subr.mxu0 0.0
      %1725 = vmatpush1.msra.mxu0 0.0
      %1726 = vmatprep.subr.mxu0 0.0
      %1727 = vmatpush1.msra.mxu0 0.0
      %1728 = vmatprep.subr.mxu0 0.0
      %1729 = vmatpush1.msra.mxu0 0.0
      %1730 = vmatprep.subr.mxu0 0.0
      %1731 = vmatpush1.msra.mxu0 0.0
      %1732 = vmatprep.subr.mxu0 0.0
      %1733 = vmatpush1.msra.mxu0 0.0
      %1734 = vmatprep.subr.mxu0 0.0
      %1735 = vmatpush1.msra.mxu0 0.0
      %1736 = vmatprep.subr.mxu0 0.0
      %1737 = vmatpush1.msra.mxu0 0.0
      %1738 = vmatprep.subr.mxu0 0.0
      %1739 = vmatpush1.msra.mxu0 0.0
      %1740 = vmatprep.subr.mxu0 0.0
      %1741 = vmatpush1.msra.mxu0 0.0
      %1742 = vmatprep.subr.mxu0 0.0
      %1743 = vmatpush1.msra.mxu0 0.0
      %1744 = vmatprep.subr.mxu0 0.0
      %1745 = vmatpush1.msra.mxu0 0.0
      %1746 = vmatprep.subr.mxu0 0.0
      %1747 = vmatpush1.msra.mxu0 0.0
      %1748 = vmatprep.subr.mxu0 0.0
      %1749 = vmatpush1.msra.mxu0 0.0
      %1750 = vmatprep.subr.mxu0 0.0
      %1751 = vmatpush1.msra.mxu0 0.0
      %1752 = vmatprep.subr.mxu0 0.0
      %1753 = vmatpush1.msra.mxu0 0.0
      %1754 = vmatprep.subr.mxu0 0.0
      %1755 = vmatpush1.msra.mxu0 0.0
      %1756 = vmatprep.subr.mxu0 0.0
      %1757 = vmatpush1.msra.mxu0 0.0
      %1758 = vmatprep.subr.mxu0 0.0
      %1759 = vmatpush1.msra.mxu0 0.0
      %1760 = vmatprep.subr.mxu0 0.0
      %1761 = vmatpush1.msra.mxu0 0.0
      %1762 = vmatprep.subr.mxu0 0.0
      %1763 = vmatpush1.msra.mxu0 0.0
      %1764 = vmatprep.mubr.f32.mxu0 0.0
      %1765 = vmatmul.mubr.f32.gmra.mrb[0].mxu0 %v1653
      %v1766 = vpop.f32.mrb[0].mxu0
      %v1767 = vadd.f32 0.0, %v1766
      %v1768 = vpop.f32.mrb[0].mxu0
      %1769 = vmatprep.mubr.f32.mxu0 0.0
      %1770 = vmatmul.mubr.f32.gmra.mrb[0].mxu0 %v1656
      %v1771 = vpop.f32.mrb[0].mxu0
      %v1772 = vadd.f32 0.0, %v1771
      %v1773 = vpop.f32.mrb[0].mxu0
      %1774 = vmatprep.mubr.f32.mxu0 0.0
      %1775 = vmatmul.mubr.f32.gmra.mrb[0].mxu0 %v1659
      %v1776 = vpop.f32.mrb[0].mxu0
      %v1777 = vadd.f32 0.0, %v1776
      %v1778 = vpop.f32.mrb[0].mxu0
      %1779 = vmatprep.mubr.f32.mxu0 0.0
      %1780 = vmatmul.mubr.f32.gmra.mrb[0].mxu0 %v1662
      %v1781 = vpop.f32.mrb[0].mxu0
      %v1782 = vadd.f32 0.0, %v1781
      %v1783 = vpop.f32.mrb[0].mxu0
      %1784 = vmatprep.mubr.f32.mxu0 0.0
      %1785 = vmatmul.mubr.f32.gmra.mrb[0].mxu0 %v1665
      %v1786 = vpop.f32.mrb[0].mxu0
      %v1787 = vadd.f32 0.0, %v1786
      %v1788 = vpop.f32.mrb[0].mxu0
      %1789 = vmatprep.mubr.f32.mxu0 0.0
      %1790 = vmatmul.mubr.f32.gmra.mrb[0].mxu0 %v1668
      %v1791 = vpop.f32.mrb[0].mxu0
      %v1792 = vadd.f32 0.0, %v1791
      %v1793 = vpop.f32.mrb[0].mxu0
      %1794 = vmatprep.mubr.f32.mxu0 0.0
      %1795 = vmatmul.mubr.f32.gmra.mrb[0].mxu0 %v1671
      %v1796 = vpop.f32.mrb[0].mxu0
      %v1797 = vadd.f32 0.0, %v1796
      %v1798 = vpop.f32.mrb[0].mxu0
      %1799 = vmatprep.mubr.f32.mxu0 0.0
      %1800 = vmatmul.mubr.f32.gmra.mrb[0].mxu0 %v1674
      %v1801 = vpop.f32.mrb[0].mxu0
      %v1802 = vadd.f32 0.0, %v1801
      %v1803 = vpop.f32.mrb[0].mxu0
      %1804 = vmatprep.mubr.f32.mxu0 0.0
      %1805 = vmatmul.mubr.f32.gmra.mrb[0].mxu0 %v1677
      %v1806 = vpop.f32.mrb[0].mxu0
      %v1807 = vadd.f32 0.0, %v1806
      %v1808 = vpop.f32.mrb[0].mxu0
      %1809 = vmatprep.mubr.f32.mxu0 0.0
      %1810 = vmatmul.mubr.f32.gmra.mrb[0].mxu0 %v1680
      %v1811 = vpop.f32.mrb[0].mxu0
      %v1812 = vadd.f32 0.0, %v1811
      %v1813 = vpop.f32.mrb[0].mxu0
      %1814 = vmatprep.mubr.f32.mxu0 0.0
      %1815 = vmatmul.mubr.f32.gmra.mrb[0].mxu0 %v1683
      %v1816 = vpop.f32.mrb[0].mxu0
      %v1817 = vadd.f32 0.0, %v1816
      %v1818 = vpop.f32.mrb[0].mxu0
      %1819 = vmatprep.mubr.f32.mxu0 0.0
      %1820 = vmatmul.mubr.f32.gmra.mrb[0].mxu0 %v1686
      %v1821 = vpop.f32.mrb[0].mxu0
      %v1822 = vadd.f32 0.0, %v1821
      %v1823 = vpop.f32.mrb[0].mxu0
      %1824 = vmatprep.mubr.f32.mxu0 0.0
      %1825 = vmatmul.mubr.f32.gmra.mrb[0].mxu0 %v1689
      %v1826 = vpop.f32.mrb[0].mxu0
      %v1827 = vadd.f32 0.0, %v1826
      %v1828 = vpop.f32.mrb[0].mxu0
      %1829 = vmatprep.mubr.f32.mxu0 0.0
      %1830 = vmatmul.mubr.f32.gmra.mrb[0].mxu0 %v1692
      %v1831 = vpop.f32.mrb[0].mxu0
      %v1832 = vadd.f32 0.0, %v1831
      %v1833 = vpop.f32.mrb[0].mxu0
      %1834 = vmatprep.mubr.f32.mxu0 0.0
      %1835 = vmatmul.mubr.f32.gmra.mrb[0].mxu0 %v1695
      %v1836 = vpop.f32.mrb[0].mxu0
      %v1837 = vadd.f32 0.0, %v1836
      %v1838 = vpop.f32.mrb[0].mxu0
      %1839 = vmatprep.mubr.f32.mxu0 0.0
      %1840 = vmatmul.mubr.f32.gmra.mrb[0].mxu0 %v1698
      %v1841 = vpop.f32.mrb[0].mxu0
      %v1842 = vadd.f32 0.0, %v1841
      %v1843 = vpop.f32.mrb[0].mxu0
      %1844 = vdwg.mxu0
      %v1846 = vsel %vm655, %v1596, 0
      %v1849 = vsel %vm655, %v1597, 0
      %v1852 = vsel %vm655, %v1598, 0
      %v1855 = vsel %vm655, %v1599, 0
      %v1858 = vsel %vm655, %v1600, 0
      %v1861 = vsel %vm655, %v1601, 0
      %v1864 = vsel %vm655, %v1602, 0
      %v1867 = vsel %vm655, %v1603, 0
      %v1870 = vsel %vm655, %v1604, 0
      %v1873 = vsel %vm655, %v1605, 0
      %v1876 = vsel %vm655, %v1606, 0
      %v1879 = vsel %vm655, %v1607, 0
      %v1882 = vsel %vm655, %v1608, 0
      %v1885 = vsel %vm655, %v1609, 0
      %v1888 = vsel %vm655, %v1610, 0
      %v1891 = vsel %vm655, %v1611, 0
      %1893 = vmatprep.subr.mxu0 0.0
      %1894 = vmatpush1.msra.mxu0 %v1644
      %1895 = vmatprep.subr.mxu0 0.0
      %1896 = vmatpush1.msra.mxu0 %v1645
      %1897 = vmatprep.subr.mxu0 0.0
      %1898 = vmatpush1.msra.mxu0 %v1646
      %1899 = vmatprep.subr.mxu0 0.0
      %1900 = vmatpush1.msra.mxu0 %v1647
      %1901 = vmatprep.subr.mxu0 0.0
      %1902 = vmatpush1.msra.mxu0 0.0
      %1903 = vmatprep.subr.mxu0 0.0
      %1904 = vmatpush1.msra.mxu0 0.0
      %1905 = vmatprep.subr.mxu0 0.0
      %1906 = vmatpush1.msra.mxu0 0.0
      %1907 = vmatprep.subr.mxu0 0.0
      %1908 = vmatpush1.msra.mxu0 0.0
      %1909 = vmatprep.subr.mxu0 0.0
      %1910 = vmatpush1.msra.mxu0 0.0
      %1911 = vmatprep.subr.mxu0 0.0
      %1912 = vmatpush1.msra.mxu0 0.0
      %1913 = vmatprep.subr.mxu0 0.0
      %1914 = vmatpush1.msra.mxu0 0.0
      %1915 = vmatprep.subr.mxu0 0.0
      %1916 = vmatpush1.msra.mxu0 0.0
      %1917 = vmatprep.subr.mxu0 0.0
      %1918 = vmatpush1.msra.mxu0 0.0
      %1919 = vmatprep.subr.mxu0 0.0
      %1920 = vmatpush1.msra.mxu0 0.0
      %1921 = vmatprep.subr.mxu0 0.0
      %1922 = vmatpush1.msra.mxu0 0.0
      %1923 = vmatprep.subr.mxu0 0.0
      %1924 = vmatpush1.msra.mxu0 0.0
      %1925 = vmatprep.subr.mxu0 0.0
      %1926 = vmatpush1.msra.mxu0 0.0
      %1927 = vmatprep.subr.mxu0 0.0
      %1928 = vmatpush1.msra.mxu0 0.0
      %1929 = vmatprep.subr.mxu0 0.0
      %1930 = vmatpush1.msra.mxu0 0.0
      %1931 = vmatprep.subr.mxu0 0.0
      %1932 = vmatpush1.msra.mxu0 0.0
      %1933 = vmatprep.subr.mxu0 0.0
      %1934 = vmatpush1.msra.mxu0 0.0
      %1935 = vmatprep.subr.mxu0 0.0
      %1936 = vmatpush1.msra.mxu0 0.0
      %1937 = vmatprep.subr.mxu0 0.0
      %1938 = vmatpush1.msra.mxu0 0.0
      %1939 = vmatprep.subr.mxu0 0.0
      %1940 = vmatpush1.msra.mxu0 0.0
      %1941 = vmatprep.subr.mxu0 0.0
      %1942 = vmatpush1.msra.mxu0 0.0
      %1943 = vmatprep.subr.mxu0 0.0
      %1944 = vmatpush1.msra.mxu0 0.0
      %1945 = vmatprep.subr.mxu0 0.0
      %1946 = vmatpush1.msra.mxu0 0.0
      %1947 = vmatprep.subr.mxu0 0.0
      %1948 = vmatpush1.msra.mxu0 0.0
      %1949 = vmatprep.subr.mxu0 0.0
      %1950 = vmatpush1.msra.mxu0 0.0
      %1951 = vmatprep.subr.mxu0 0.0
      %1952 = vmatpush1.msra.mxu0 0.0
      %1953 = vmatprep.subr.mxu0 0.0
      %1954 = vmatpush1.msra.mxu0 0.0
      %1955 = vmatprep.subr.mxu0 0.0
      %1956 = vmatpush1.msra.mxu0 0.0
      %1957 = vmatprep.mubr.f32.mxu0 0.0
      %1958 = vmatmul.mubr.f32.gmra.mrb[0].mxu0 %v1846
      %v1959 = vpop.f32.mrb[0].mxu0
      %v1960 = vadd.f32 %v1767, %v1959
      %v1961 = vpop.f32.mrb[0].mxu0
      %1962 = vmatprep.mubr.f32.mxu0 0.0
      %1963 = vmatmul.mubr.f32.gmra.mrb[0].mxu0 %v1849
      %v1964 = vpop.f32.mrb[0].mxu0
      %v1965 = vadd.f32 %v1772, %v1964
      %v1966 = vpop.f32.mrb[0].mxu0
      %1967 = vmatprep.mubr.f32.mxu0 0.0
      %1968 = vmatmul.mubr.f32.gmra.mrb[0].mxu0 %v1852
      %v1969 = vpop.f32.mrb[0].mxu0
      %v1970 = vadd.f32 %v1777, %v1969
      %v1971 = vpop.f32.mrb[0].mxu0
      %1972 = vmatprep.mubr.f32.mxu0 0.0
      %1973 = vmatmul.mubr.f32.gmra.mrb[0].mxu0 %v1855
      %v1974 = vpop.f32.mrb[0].mxu0
      %v1975 = vadd.f32 %v1782, %v1974
      %v1976 = vpop.f32.mrb[0].mxu0
      %1977 = vmatprep.mubr.f32.mxu0 0.0
      %1978 = vmatmul.mubr.f32.gmra.mrb[0].mxu0 %v1858
      %v1979 = vpop.f32.mrb[0].mxu0
      %v1980 = vadd.f32 %v1787, %v1979
      %v1981 = vpop.f32.mrb[0].mxu0
      %1982 = vmatprep.mubr.f32.mxu0 0.0
      %1983 = vmatmul.mubr.f32.gmra.mrb[0].mxu0 %v1861
      %v1984 = vpop.f32.mrb[0].mxu0
      %v1985 = vadd.f32 %v1792, %v1984
      %v1986 = vpop.f32.mrb[0].mxu0
      %1987 = vmatprep.mubr.f32.mxu0 0.0
      %1988 = vmatmul.mubr.f32.gmra.mrb[0].mxu0 %v1864
      %v1989 = vpop.f32.mrb[0].mxu0
      %v1990 = vadd.f32 %v1797, %v1989
      %v1991 = vpop.f32.mrb[0].mxu0
      %1992 = vmatprep.mubr.f32.mxu0 0.0
      %1993 = vmatmul.mubr.f32.gmra.mrb[0].mxu0 %v1867
      %v1994 = vpop.f32.mrb[0].mxu0
      %v1995 = vadd.f32 %v1802, %v1994
      %v1996 = vpop.f32.mrb[0].mxu0
      %1997 = vmatprep.mubr.f32.mxu0 0.0
      %1998 = vmatmul.mubr.f32.gmra.mrb[0].mxu0 %v1870
      %v1999 = vpop.f32.mrb[0].mxu0
      %v2000 = vadd.f32 %v1807, %v1999
      %v2001 = vpop.f32.mrb[0].mxu0
      %2002 = vmatprep.mubr.f32.mxu0 0.0
      %2003 = vmatmul.mubr.f32.gmra.mrb[0].mxu0 %v1873
      %v2004 = vpop.f32.mrb[0].mxu0
      %v2005 = vadd.f32 %v1812, %v2004
      %v2006 = vpop.f32.mrb[0].mxu0
      %2007 = vmatprep.mubr.f32.mxu0 0.0
      %2008 = vmatmul.mubr.f32.gmra.mrb[0].mxu0 %v1876
      %v2009 = vpop.f32.mrb[0].mxu0
      %v2010 = vadd.f32 %v1817, %v2009
      %v2011 = vpop.f32.mrb[0].mxu0
      %2012 = vmatprep.mubr.f32.mxu0 0.0
      %2013 = vmatmul.mubr.f32.gmra.mrb[0].mxu0 %v1879
      %v2014 = vpop.f32.mrb[0].mxu0
      %v2015 = vadd.f32 %v1822, %v2014
      %v2016 = vpop.f32.mrb[0].mxu0
      %2017 = vmatprep.mubr.f32.mxu0 0.0
      %2018 = vmatmul.mubr.f32.gmra.mrb[0].mxu0 %v1882
      %v2019 = vpop.f32.mrb[0].mxu0
      %v2020 = vadd.f32 %v1827, %v2019
      %v2021 = vpop.f32.mrb[0].mxu0
      %2022 = vmatprep.mubr.f32.mxu0 0.0
      %2023 = vmatmul.mubr.f32.gmra.mrb[0].mxu0 %v1885
      %v2024 = vpop.f32.mrb[0].mxu0
      %v2025 = vadd.f32 %v1832, %v2024
      %v2026 = vpop.f32.mrb[0].mxu0
      %2027 = vmatprep.mubr.f32.mxu0 0.0
      %2028 = vmatmul.mubr.f32.gmra.mrb[0].mxu0 %v1888
      %v2029 = vpop.f32.mrb[0].mxu0
      %v2030 = vadd.f32 %v1837, %v2029
      %v2031 = vpop.f32.mrb[0].mxu0
      %2032 = vmatprep.mubr.f32.mxu0 0.0
      %2033 = vmatmul.mubr.f32.gmra.mrb[0].mxu0 %v1891
      %v2034 = vpop.f32.mrb[0].mxu0
      %v2035 = vadd.f32 %v1842, %v2034
      %v2036 = vpop.f32.mrb[0].mxu0
      %2037 = vdwg.mxu0
      %v2038 = vld [vmem:[%s10] sm:$0x1]
      %v2040 = vlaneseq
      %v2041 = vshrl.u32 %v2040, 7
      %v2042 = vsub.s32 0, %v2041
      %v2043 = vrot.slane %v2038, %v2042
      %v2045 = vadd.f32 %v1960, %v2043
      %v2046 = vadd.f32 %v1965, %v2043
      %v2047 = vadd.f32 %v1970, %v2043
      %v2048 = vadd.f32 %v1975, %v2043
      %v2049 = vadd.f32 %v1980, %v2043
      %v2050 = vadd.f32 %v1985, %v2043
      %v2051 = vadd.f32 %v1990, %v2043
      %v2052 = vadd.f32 %v1995, %v2043
      %v2053 = vadd.f32 %v2000, %v2043
      %v2054 = vadd.f32 %v2005, %v2043
      %v2055 = vadd.f32 %v2010, %v2043
      %v2056 = vadd.f32 %v2015, %v2043
      %v2057 = vadd.f32 %v2020, %v2043
      %v2058 = vadd.f32 %v2025, %v2043
      %v2059 = vadd.f32 %v2030, %v2043
      %v2060 = vadd.f32 %v2035, %v2043
      %vm2061 = vcmask 523264
      %2062 = vst.msk [vmem:[%s410] sm:$0xff] %vm2061, %v2045
      %2063 = vst.msk [vmem:[%s410 + $0x8] sm:$0xff] %vm2061, %v2046
      %2064 = vst.msk [vmem:[%s410 + $0x10] sm:$0xff] %vm2061, %v2047
      %2065 = vst.msk [vmem:[%s410 + $0x18] sm:$0xff] %vm2061, %v2048
      %2066 = vst.msk [vmem:[%s410 + $0x20] sm:$0xff] %vm2061, %v2049
      %2067 = vst.msk [vmem:[%s410 + $0x28] sm:$0xff] %vm2061, %v2050
      %2068 = vst.msk [vmem:[%s410 + $0x30] sm:$0xff] %vm2061, %v2051
      %2069 = vst.msk [vmem:[%s410 + $0x38] sm:$0xff] %vm2061, %v2052
      %2070 = vst.msk [vmem:[%s410 + $0x40] sm:$0xff] %vm2061, %v2053
      %2071 = vst.msk [vmem:[%s410 + $0x48] sm:$0xff] %vm2061, %v2054
      %2072 = vst.msk [vmem:[%s410 + $0x50] sm:$0xff] %vm2061, %v2055
      %2073 = vst.msk [vmem:[%s410 + $0x58] sm:$0xff] %vm2061, %v2056
      %2074 = vst.msk [vmem:[%s410 + $0x60] sm:$0xff] %vm2061, %v2057
      %2075 = vst.msk [vmem:[%s410 + $0x68] sm:$0xff] %vm2061, %v2058
      %2076 = vst.msk [vmem:[%s410 + $0x70] sm:$0xff] %vm2061, %v2059
      %2077 = vst.msk [vmem:[%s410 + $0x78] sm:$0xff] %vm2061, %v2060
      %s2078 = smul.u32 16, %s22
      %p2079 = scmp.lt.s32.totalorder %s2078, 31
      %s2080 = scalar_select %p2079, %s2078, 31
      %s2081 = smul.addr %s2080, 8
      %s2082 = scalar_lea.vmem %s11, %s2081
      // Predicated region
      $region65: #{tpu_custom_call.1} parent=63 // pred_check
        %p2083 = pneg %p281
      $region66: #{tpu_custom_call.1} parent=63 // pred_check_branch
        %2085 = sbr.rel (%p2083) target = $region68
      $region67: #{tpu_custom_call.1} parent=63 // pred_region
        %s2086 = smul.u32 16, %s22
      $region68: #{tpu_custom_call.1} parent=63 // pred_fallthru
        _
    $region64: #{tpu_custom_call.1} parent=5 // pred_fallthru
      _
    %p2087 = scmp.le.s32.totalorder 2, %s17
    // Predicated region
    $region69: #{tpu_custom_call.1} parent=5 // pred_check
      %p2088 = pneg %p2087
    $region70: #{tpu_custom_call.1} parent=5 // pred_check_branch
      %2090 = sbr.rel (%p2088) target = $region72
    $region71: #{tpu_custom_call.1} parent=5 // pred_region
      %s2091 = ssub.s32 %s17, 2
      // Predicated region
      $region73: #{tpu_custom_call.1} parent=71 // pred_check
        %p2092 = pneg %p287
      $region74: #{tpu_custom_call.1} parent=71 // pred_check_branch
        %2094 = sbr.rel (%p2092) target = $region76
      $region75: #{tpu_custom_call.1} parent=71 // pred_region
        %s2095 = smul.u32 16, %s23
        %p2096 = scmp.lt.s32.totalorder %s2095, 31
        %s2097 = scalar_select %p2096, %s2095, 31
        %s2098 = smul.addr %s2097, 8
        %s2099 = scalar_lea.vmem %s11, %s2098
      $region76: #{tpu_custom_call.1} parent=71 // pred_fallthru
        _
    $region72: #{tpu_custom_call.1} parent=5 // pred_fallthru
      _
  $region6: #{tpu_custom_call.1} parent=0 // loop_footer
    %s21 = sadd.s32 1, %s17
  $region7: #{tpu_custom_call.1} parent=0 // loop_footer_branch
    %16 = sbr.rel target = $region3
  $region8: #{tpu_custom_call.1} parent=0 // loop_exit
    _

</llo_original>
